<compile_context>
chip_gen: v7x
topology: tpu7x:2x2x1
jax: 0.10.0
libtpu: 0.0.40
codegen_flags: <defaults>
</compile_context>

<pallas_src>
import functools

import jax
import jax.numpy as jnp
from jax import lax
from jax.experimental import pallas as pl
from jax.experimental.pallas import tpu as pltpu


def _round_up(x: int, m: int) -> int:
    return ((x + m - 1) // m) * m


def _vq_kernel(x_ref, e_ref, e2_ref, q_ref, idx_ref, cnt_ref, err_ref,
               *, n_rows: int, tnp: int, p: int, k_pad: int):
    pid = pl.program_id(0)

    x_raw = x_ref[...]          # (TNP, W)       packed input rows (W = P*D)
    e_bd = e_ref[...]           # (W, P*K_pad)   block-diagonal codebook
    e2 = e2_ref[...]            # (1, P*K_pad)   0.5*||e_k||^2 (+1e30 pad bias)

    # Ragged tail of the last block: OOB rows contain garbage and must be
    # zeroed via select (garbage Inf/NaN * 0.0 would poison the reductions).
    row_ids = pid * tnp + lax.broadcasted_iota(jnp.int32, (tnp, 1), 0)
    valid_row = row_ids < n_rows                                   # (TNP, 1)
    x = jnp.where(valid_row, x_raw, 0.0)

    # argmin_k ||x - e_k||^2 == argmin_k (0.5*||e_k||^2 - x.e_k)
    # (x^2 dropped: constant per row; global factor 2 folded into e2)
    xe = jnp.dot(x, e_bd, preferred_element_type=jnp.float32)      # (TNP, P*K_pad)
    d = e2 - xe

    col = lax.broadcasted_iota(jnp.int32, (1, k_pad), 1)   # one sublane row
    code_row = col.astype(jnp.float32)                     # (1, K_pad)
    sub_iota = lax.broadcasted_iota(jnp.int32, (p, 1), 0)  # (P, 1)

    lane_ids = pid * tnp + lax.broadcasted_iota(jnp.int32, (1, tnp), 1)
    valid_lane = (lane_ids < n_rows).astype(jnp.float32)           # (1, TNP)

    q_acc = jnp.zeros(x_raw.shape, jnp.float32)        # (TNP, W)
    idx_acc = jnp.zeros((p, tnp), jnp.float32)         # lane-dense indices
    cnt_acc = jnp.zeros((1, k_pad), jnp.float32)       # per-code counts
    min_sum = jnp.zeros((tnp, 1), jnp.float32)

    for g in range(p):                                  # static, unrolled (p <= 4)
        d_g = d[:, g * k_pad:(g + 1) * k_pad]           # lane-aligned slice
        e_g = e_bd[:, g * k_pad:(g + 1) * k_pad]        # (W, K_pad), block-diag col

        min_g = jnp.min(d_g, axis=1, keepdims=True)                 # (TNP, 1)
        # first-occurrence tie-break (matches torch.argmin)
        idx_g = jnp.min(jnp.where(d_g == min_g, col, k_pad),
                        axis=1, keepdims=True)                      # (TNP, 1)
        enc_g = (col == idx_g).astype(jnp.float32)                  # one-hot

        # codebook gather that lands directly in this group's packed lanes
        q_acc = q_acc + lax.dot_general(
            enc_g, e_g, (((1,), (1,)), ((), ())),
            preferred_element_type=jnp.float32)                     # (TNP, W)

        # lane-dense indices on the (otherwise idle) MXU:
        # row g of g_sel holds [0..K_pad); g_sel @ enc_g^T -> (P, TNP), row g set
        g_sel = jnp.where(sub_iota == g, code_row, 0.0)             # (P, K_pad)
        idx_acc = idx_acc + lax.dot_general(
            g_sel, enc_g, (((1,), (1,)), ((), ())),
            preferred_element_type=jnp.float32)

        # per-code counts of valid rows (groups summed together)
        cnt_acc = cnt_acc + lax.dot_general(
            valid_lane, enc_g, (((1,), (0,)), ((), ())),
            preferred_element_type=jnp.float32)                     # (1, K_pad)

        min_sum = min_sum + min_g

    q_ref[...] = q_acc
    idx_ref[...] = idx_acc.astype(jnp.int32).reshape(1, p, tnp)
    cnt_ref[...] = cnt_acc.reshape(1, 1, k_pad)

    # squared error from available pieces: ||x - e_idx||^2 = ||x||^2 + 2*min_d
    xx = jnp.sum(x * x, axis=1, keepdims=True)                      # (TNP, 1)
    err_rows = jnp.where(valid_row, xx + 2.0 * min_sum, 0.0)
    err_ref[...] = jnp.sum(err_rows, keepdims=True).reshape(1, 1, 1)


def vector_quantizer_forward(inputs, embedding, commitment_cost=0.25,
                             block_rows=2048):
    """Pallas implementation of VectorQuantizer.forward (channel-last inputs).

    inputs:    (..., D) float32, D == embedding_dim (flattened to (-1, D))
    embedding: (K, D)   float32 codebook
    Returns (quantized, loss, perplexity, encoding_indices).
    """
    input_shape = inputs.shape
    K, D = embedding.shape
    flat = inputs.reshape(-1, D).astype(jnp.float32)
    N = flat.shape[0]

    # Row packing factor: P rows share one 128-lane packed row (lane-dense x/q).
    if D < 128 and 128 % D == 0 and N % (128 // D) == 0:
        p = 128 // D
    else:
        p = 1
    w = p * D
    n_rows = N // p
    x_packed = flat.reshape(n_rows, w)      # contiguous row-major: free reshape

    k_pad = _round_up(K, 128)
    assert k_pad < (1 << 24), "f32 MXU index trick requires K_pad < 2^24"
    pk = p * k_pad

    e = embedding.astype(jnp.float32)
    # Block-diagonal codebook: column group g holds e^T in rows [g*D, (g+1)*D).
    e_bd = jnp.zeros((w, pk), jnp.float32)
    for g in range(p):
        e_bd = e_bd.at[g * D:(g + 1) * D, g * k_pad:g * k_pad + K].set(e.T)
    # 0.5*||e_k||^2 (factor 2 folded out of the distance); padded codes get a
    # huge bias so they can never win the argmin.  Tiled once per group.
    e2 = 0.5 * jnp.sum(e * e, axis=1)
    e2_pad = jnp.full((k_pad,), 1e30, jnp.float32).at[:K].set(e2)
    e2_tiled = jnp.tile(e2_pad, (p,)).reshape(1, pk)

    # Tile sizing in packed-row space (~block_rows original rows per grid step).
    tnp = max(8, min(_round_up(block_rows, p) // p, _round_up(n_rows, 8)))
    tnp = _round_up(tnp, 8)
    lanes_w = _round_up(w, 128)

    def _vmem_estimate(t):
        io = 2 * 2 * t * lanes_w * 4            # x + q tiles, double-buffered
        tmp = 4 * t * pk * 4                    # xe / d / one-hot temporaries
        book = 2 * (w * pk + 2 * pk) * 4        # codebook + norms
        small = 2 * (p * _round_up(t, 128) + k_pad + 8) * 4
        return io + tmp + book + small

    # Keep the working set comfortably inside v7x's 64 MiB physical VMEM.
    while tnp > 8 and _vmem_estimate(tnp) > 40 * 1024 * 1024:
        tnp = max(8, _round_up(tnp // 2, 8))
    vmem_limit = int(min(64 * 1024 * 1024,
                         max(32 * 1024 * 1024, _vmem_estimate(tnp) * 5 // 4)))

    grid = pl.cdiv(n_rows, tnp)

    kernel = functools.partial(_vq_kernel, n_rows=n_rows, tnp=tnp, p=p,
                               k_pad=k_pad)

    cost = pl.CostEstimate(
        flops=int(4 * n_rows * w * pk),
        transcendentals=0,
        bytes_accessed=int(2 * n_rows * w * 4 + (w * pk + pk) * 4
                           + N * 4 + grid * (k_pad + 1) * 4),
    )

    q, idx, cnt, err = pl.pallas_call(
        kernel,
        grid=(grid,),
        out_shape=(
            jax.ShapeDtypeStruct((n_rows, w), jnp.float32),       # quantized
            jax.ShapeDtypeStruct((grid, p, tnp), jnp.int32),      # indices
            jax.ShapeDtypeStruct((grid, 1, k_pad), jnp.float32),  # count partials
            jax.ShapeDtypeStruct((grid, 1, 1), jnp.float32),      # sq-err partials
        ),
        in_specs=[
            pl.BlockSpec((tnp, w), lambda i: (i, 0)),      # x tile (pipelined)
            pl.BlockSpec((w, pk), lambda i: (0, 0)),       # codebook (resident)
            pl.BlockSpec((1, pk), lambda i: (0, 0)),       # 0.5*||e||^2 (resident)
        ],
        out_specs=(
            pl.BlockSpec((tnp, w), lambda i: (i, 0)),          # quantized tile
            pl.BlockSpec((1, p, tnp), lambda i: (i, 0, 0)),    # lane-dense idx
            pl.BlockSpec((1, 1, k_pad), lambda i: (i, 0, 0)),  # partial counts
            pl.BlockSpec((1, 1, 1), lambda i: (i, 0, 0)),      # partial sq-err
        ),
        compiler_params=pltpu.CompilerParams(
            dimension_semantics=("parallel",),
            vmem_limit_bytes=vmem_limit,
        ),
        cost_estimate=cost,
    )(x_packed, e_bd, e2_tiled)

    # Tiny XLA reductions over the per-tile partials.
    total_err = jnp.sum(err)
    counts = jnp.sum(cnt.reshape(grid, k_pad), axis=0)[:K]

    # mse(quantized, inputs): same value for q_latent_loss and e_latent_loss.
    mse = total_err / jnp.float32(N * D)
    loss = mse + commitment_cost * mse

    quantized = q.reshape(input_shape)
    # straight-through estimator: forward value == quantized
    quantized = inputs + lax.stop_gradient(quantized - inputs)

    avg_probs = counts / jnp.float32(N)
    perplexity = jnp.exp(-jnp.sum(avg_probs * jnp.log(avg_probs + 1e-10)))

    # idx[tile, g, r] belongs to original flat row  p*(tile*tnp + r) + g.
    encoding_indices = (jnp.transpose(idx, (0, 2, 1)).reshape(-1)[:N]
                        .reshape(input_shape[:-1]))
    return quantized, loss, perplexity, encoding_indices


if __name__ == "__main__":
    # module config (small)
    num_embeddings = 64     # K  (pads to 128 lanes inside the kernel)
    embedding_dim = 32      # D  -> 4-way row packing (128 lanes per packed row)
    commitment_cost = 0.25

    # deterministic params: uniform(-1/K, 1/K), same as the PyTorch init
    key = jax.random.PRNGKey(0)
    k_emb, k_x = jax.random.split(key)
    embedding = jax.random.uniform(
        k_emb, (num_embeddings, embedding_dim),
        minval=-1.0 / num_embeddings, maxval=1.0 / num_embeddings,
        dtype=jnp.float32)

    # small channel-last latents entering the VQ layer: (B, H, W, D)
    # N = 2*12*12 = 288 rows -> 72 packed rows; block_rows=128 -> 3 grid steps,
    # ragged last tile (8 of 32 packed rows valid) exercises the tail masking.
    B, H, W = 2, 12, 12
    x = jax.random.normal(k_x, (B, H, W, embedding_dim), dtype=jnp.float32)

    quantized, loss, perplexity, indices = vector_quantizer_forward(
        x, embedding, commitment_cost, block_rows=128)
    jax.block_until_ready((quantized, loss, perplexity, indices))

    # pure-JAX reference (mirrors the PyTorch math)
    flat = x.reshape(-1, embedding_dim)
    d_ref = (jnp.sum(flat ** 2, axis=1, keepdims=True)
             + jnp.sum(embedding ** 2, axis=1)
             - 2.0 * flat @ embedding.T)
    idx_ref = jnp.argmin(d_ref, axis=1)
    q_ref = embedding[idx_ref].reshape(x.shape)
    mse_ref = jnp.mean((q_ref - x) ** 2)
    loss_ref = mse_ref + commitment_cost * mse_ref
    cnt_ref = jnp.sum(jax.nn.one_hot(idx_ref, num_embeddings,
                                     dtype=jnp.float32), axis=0)
    avg_ref = cnt_ref / jnp.float32(flat.shape[0])
    ppl_ref = jnp.exp(-jnp.sum(avg_ref * jnp.log(avg_ref + 1e-10)))

    assert indices.shape == (B, H, W)
    assert quantized.shape == x.shape
    assert jnp.all(indices == idx_ref.reshape(B, H, W))
    assert jnp.allclose(quantized, q_ref, atol=1e-5)
    assert jnp.allclose(loss, loss_ref, rtol=1e-5, atol=1e-6)
    assert jnp.allclose(perplexity, ppl_ref, rtol=1e-5, atol=1e-4)

    print("KERNEL_OK")
</pallas_src>

<mosaic_0001>
module attributes {stable_mosaic.version = 11 : i64} {
  func.func @_vq_kernel(%arg0: i32, %arg1: memref<32x128xf32, #tpu.memory_space<vmem>>, %arg2: memref<128x512xf32, #tpu.memory_space<vmem>>, %arg3: memref<1x512xf32, #tpu.memory_space<vmem>>, %arg4: memref<32x128xf32, #tpu.memory_space<vmem>>, %arg5: memref<1x4x32xi32, #tpu.memory_space<vmem>>, %arg6: memref<1x1x128xf32, #tpu.memory_space<vmem>>, %arg7: memref<1x1x1xf32, #tpu.memory_space<vmem>>) attributes {dimension_semantics = [#tpu.dimension_semantics<parallel>], iteration_bounds = array<i64: 3>, scalar_prefetch = 0 : i64, scratch_operands = 0 : i64, tpu.core_type = #tpu.core_type<tc>, window_params = [{transform_indices = @transform_0, window_bounds = array<i64: 32, 128>}, {pipeline_mode = #tpu.pipeline_mode<synchronous>, transform_indices = @transform_1, window_bounds = array<i64: 128, 512>}, {pipeline_mode = #tpu.pipeline_mode<synchronous>, transform_indices = @transform_2, window_bounds = array<i64: 1, 512>}, {transform_indices = @transform_3, window_bounds = array<i64: 32, 128>}, {transform_indices = @transform_4, window_bounds = array<i64: 1, 4, 32>}, {transform_indices = @transform_5, window_bounds = array<i64: 1, 1, 128>}, {transform_indices = @transform_6, window_bounds = array<i64: 1, 1, 1>}]} {
    %c0 = arith.constant 0 : index
    %c0_0 = arith.constant 0 : index
    %0 = vector.load %arg1[%c0, %c0_0] : memref<32x128xf32, #tpu.memory_space<vmem>>, vector<32x128xf32>
    %c0_1 = arith.constant 0 : index
    %c0_2 = arith.constant 0 : index
    %1 = vector.load %arg2[%c0_1, %c0_2] : memref<128x512xf32, #tpu.memory_space<vmem>>, vector<128x512xf32>
    %c0_3 = arith.constant 0 : index
    %c0_4 = arith.constant 0 : index
    %2 = vector.load %arg3[%c0_3, %c0_4] : memref<1x512xf32, #tpu.memory_space<vmem>>, vector<1x512xf32>
    %c32_i32 = arith.constant 32 : i32
    %3 = arith.muli %arg0, %c32_i32 : i32
    %4 = tpu.iota {dimensions = array<i32: 0>} : vector<32x1xi32>
    %5 = vector.broadcast %3 : i32 to vector<32x1xi32>
    %6 = arith.addi %5, %4 : vector<32x1xi32>
    %c72_i32 = arith.constant 72 : i32
    %7 = vector.broadcast %c72_i32 : i32 to vector<32x1xi32>
    %8 = arith.cmpi slt, %6, %7 : vector<32x1xi32>
    %cst = arith.constant 0.000000e+00 : f32
    %9 = vector.shape_cast %8 : vector<32x1xi1> to vector<32x1xi1>
    %10 = vector.broadcast %9 : vector<32x1xi1> to vector<32x128xi1>
    %11 = vector.broadcast %cst : f32 to vector<32x128xf32>
    %12 = arith.select %10, %0, %11 : vector<32x128xi1>, vector<32x128xf32>
    %cst_5 = arith.constant dense<0.000000e+00> : vector<32x512xf32>
    %13 = tpu.matmul %12, %1, %cst_5 {dimension_numbers = #tpu.dot_dimension_numbers<[1], [0], [0], [1], [0, 0, 1, 1], [], []>} : vector<32x128xf32>, vector<128x512xf32>, vector<32x512xf32> -> vector<32x512xf32>
    %14 = vector.broadcast %2 : vector<1x512xf32> to vector<32x512xf32>
    %15 = arith.subf %14, %13 : vector<32x512xf32>
    %16 = tpu.iota {dimensions = array<i32: 1>} : vector<1x128xi32>
    %17 = arith.sitofp %16 : vector<1x128xi32> to vector<1x128xf32>
    %18 = tpu.iota {dimensions = array<i32: 0>} : vector<4x1xi32>
    %c32_i32_6 = arith.constant 32 : i32
    %19 = arith.muli %arg0, %c32_i32_6 : i32
    %20 = tpu.iota {dimensions = array<i32: 1>} : vector<1x32xi32>
    %21 = vector.broadcast %19 : i32 to vector<1x32xi32>
    %22 = arith.addi %21, %20 : vector<1x32xi32>
    %c72_i32_7 = arith.constant 72 : i32
    %23 = vector.broadcast %c72_i32_7 : i32 to vector<1x32xi32>
    %24 = arith.cmpi slt, %22, %23 : vector<1x32xi32>
    %25 = arith.extui %24 : vector<1x32xi1> to vector<1x32xi32>
    %26 = arith.sitofp %25 : vector<1x32xi32> to vector<1x32xf32>
    %cst_8 = arith.constant 0.000000e+00 : f32
    %27 = vector.broadcast %cst_8 : f32 to vector<32x128xf32>
    %cst_9 = arith.constant 0.000000e+00 : f32
    %28 = vector.broadcast %cst_9 : f32 to vector<4x32xf32>
    %cst_10 = arith.constant 0.000000e+00 : f32
    %29 = vector.broadcast %cst_10 : f32 to vector<1x128xf32>
    %cst_11 = arith.constant 0.000000e+00 : f32
    %30 = vector.broadcast %cst_11 : f32 to vector<32x1xf32>
    %31 = vector.extract_strided_slice %15 {offsets = [0, 0], sizes = [32, 128], strides = [1, 1]} : vector<32x512xf32> to vector<32x128xf32>
    %32 = vector.extract_strided_slice %1 {offsets = [0, 0], sizes = [128, 128], strides = [1, 1]} : vector<128x512xf32> to vector<128x128xf32>
    %cst_12 = arith.constant dense<0x7F800000> : vector<32xf32>
    %33 = vector.multi_reduction <minimumf>, %31, %cst_12 [1] : vector<32x128xf32> to vector<32xf32>
    %34 = vector.shape_cast %33 : vector<32xf32> to vector<32x1xf32>
    %35 = vector.broadcast %34 : vector<32x1xf32> to vector<32x128xf32>
    %36 = arith.cmpf oeq, %31, %35 : vector<32x128xf32>
    %c128_i32 = arith.constant 128 : i32
    %37 = vector.shape_cast %16 : vector<1x128xi32> to vector<1x128xi32>
    %38 = vector.broadcast %37 : vector<1x128xi32> to vector<32x128xi32>
    %39 = vector.broadcast %c128_i32 : i32 to vector<32x128xi32>
    %40 = arith.select %36, %38, %39 : vector<32x128xi1>, vector<32x128xi32>
    %cst_13 = arith.constant dense<2147483647> : vector<32xi32>
    %41 = vector.multi_reduction <minsi>, %40, %cst_13 [1] : vector<32x128xi32> to vector<32xi32>
    %42 = vector.shape_cast %41 : vector<32xi32> to vector<32x1xi32>
    %43 = vector.broadcast %16 : vector<1x128xi32> to vector<32x128xi32>
    %44 = vector.broadcast %42 : vector<32x1xi32> to vector<32x128xi32>
    %45 = arith.cmpi eq, %43, %44 : vector<32x128xi32>
    %46 = arith.extui %45 : vector<32x128xi1> to vector<32x128xi32>
    %47 = arith.sitofp %46 : vector<32x128xi32> to vector<32x128xf32>
    %cst_14 = arith.constant dense<0.000000e+00> : vector<32x128xf32>
    %48 = tpu.matmul %47, %32, %cst_14 {dimension_numbers = #tpu.dot_dimension_numbers<[1], [1], [0], [0], [0, 0, 1, 0], [], []>} : vector<32x128xf32>, vector<128x128xf32>, vector<32x128xf32> -> vector<32x128xf32>
    %49 = arith.addf %27, %48 : vector<32x128xf32>
    %c0_i32 = arith.constant 0 : i32
    %50 = vector.broadcast %c0_i32 : i32 to vector<4x1xi32>
    %51 = arith.cmpi eq, %18, %50 : vector<4x1xi32>
    %cst_15 = arith.constant 0.000000e+00 : f32
    %52 = vector.shape_cast %51 : vector<4x1xi1> to vector<4x1xi1>
    %53 = vector.broadcast %52 : vector<4x1xi1> to vector<4x128xi1>
    %54 = vector.shape_cast %17 : vector<1x128xf32> to vector<1x128xf32>
    %55 = vector.broadcast %54 : vector<1x128xf32> to vector<4x128xf32>
    %56 = vector.broadcast %cst_15 : f32 to vector<4x128xf32>
    %57 = arith.select %53, %55, %56 : vector<4x128xi1>, vector<4x128xf32>
    %cst_16 = arith.constant dense<0.000000e+00> : vector<4x32xf32>
    %58 = tpu.matmul %57, %47, %cst_16 {dimension_numbers = #tpu.dot_dimension_numbers<[1], [1], [0], [0], [0, 0, 1, 0], [], []>} : vector<4x128xf32>, vector<32x128xf32>, vector<4x32xf32> -> vector<4x32xf32>
    %59 = arith.addf %28, %58 : vector<4x32xf32>
    %cst_17 = arith.constant dense<0.000000e+00> : vector<1x128xf32>
    %60 = tpu.matmul %26, %47, %cst_17 {dimension_numbers = #tpu.dot_dimension_numbers<[1], [0], [0], [1], [0, 0, 1, 1], [], []>} : vector<1x32xf32>, vector<32x128xf32>, vector<1x128xf32> -> vector<1x128xf32>
    %61 = arith.addf %29, %60 : vector<1x128xf32>
    %62 = arith.addf %30, %34 : vector<32x1xf32>
    %63 = vector.extract_strided_slice %15 {offsets = [0, 128], sizes = [32, 128], strides = [1, 1]} : vector<32x512xf32> to vector<32x128xf32>
    %64 = vector.extract_strided_slice %1 {offsets = [0, 128], sizes = [128, 128], strides = [1, 1]} : vector<128x512xf32> to vector<128x128xf32>
    %cst_18 = arith.constant dense<0x7F800000> : vector<32xf32>
    %65 = vector.multi_reduction <minimumf>, %63, %cst_18 [1] : vector<32x128xf32> to vector<32xf32>
    %66 = vector.shape_cast %65 : vector<32xf32> to vector<32x1xf32>
    %67 = vector.broadcast %66 : vector<32x1xf32> to vector<32x128xf32>
    %68 = arith.cmpf oeq, %63, %67 : vector<32x128xf32>
    %c128_i32_19 = arith.constant 128 : i32
    %69 = vector.shape_cast %16 : vector<1x128xi32> to vector<1x128xi32>
    %70 = vector.broadcast %69 : vector<1x128xi32> to vector<32x128xi32>
    %71 = vector.broadcast %c128_i32_19 : i32 to vector<32x128xi32>
    %72 = arith.select %68, %70, %71 : vector<32x128xi1>, vector<32x128xi32>
    %cst_20 = arith.constant dense<2147483647> : vector<32xi32>
    %73 = vector.multi_reduction <minsi>, %72, %cst_20 [1] : vector<32x128xi32> to vector<32xi32>
    %74 = vector.shape_cast %73 : vector<32xi32> to vector<32x1xi32>
    %75 = vector.broadcast %16 : vector<1x128xi32> to vector<32x128xi32>
    %76 = vector.broadcast %74 : vector<32x1xi32> to vector<32x128xi32>
    %77 = arith.cmpi eq, %75, %76 : vector<32x128xi32>
    %78 = arith.extui %77 : vector<32x128xi1> to vector<32x128xi32>
    %79 = arith.sitofp %78 : vector<32x128xi32> to vector<32x128xf32>
    %cst_21 = arith.constant dense<0.000000e+00> : vector<32x128xf32>
    %80 = tpu.matmul %79, %64, %cst_21 {dimension_numbers = #tpu.dot_dimension_numbers<[1], [1], [0], [0], [0, 0, 1, 0], [], []>} : vector<32x128xf32>, vector<128x128xf32>, vector<32x128xf32> -> vector<32x128xf32>
    %81 = arith.addf %49, %80 : vector<32x128xf32>
    %c1_i32 = arith.constant 1 : i32
    %82 = vector.broadcast %c1_i32 : i32 to vector<4x1xi32>
    %83 = arith.cmpi eq, %18, %82 : vector<4x1xi32>
    %cst_22 = arith.constant 0.000000e+00 : f32
    %84 = vector.shape_cast %83 : vector<4x1xi1> to vector<4x1xi1>
    %85 = vector.broadcast %84 : vector<4x1xi1> to vector<4x128xi1>
    %86 = vector.shape_cast %17 : vector<1x128xf32> to vector<1x128xf32>
    %87 = vector.broadcast %86 : vector<1x128xf32> to vector<4x128xf32>
    %88 = vector.broadcast %cst_22 : f32 to vector<4x128xf32>
    %89 = arith.select %85, %87, %88 : vector<4x128xi1>, vector<4x128xf32>
    %cst_23 = arith.constant dense<0.000000e+00> : vector<4x32xf32>
    %90 = tpu.matmul %89, %79, %cst_23 {dimension_numbers = #tpu.dot_dimension_numbers<[1], [1], [0], [0], [0, 0, 1, 0], [], []>} : vector<4x128xf32>, vector<32x128xf32>, vector<4x32xf32> -> vector<4x32xf32>
    %91 = arith.addf %59, %90 : vector<4x32xf32>
    %cst_24 = arith.constant dense<0.000000e+00> : vector<1x128xf32>
    %92 = tpu.matmul %26, %79, %cst_24 {dimension_numbers = #tpu.dot_dimension_numbers<[1], [0], [0], [1], [0, 0, 1, 1], [], []>} : vector<1x32xf32>, vector<32x128xf32>, vector<1x128xf32> -> vector<1x128xf32>
    %93 = arith.addf %61, %92 : vector<1x128xf32>
    %94 = arith.addf %62, %66 : vector<32x1xf32>
    %95 = vector.extract_strided_slice %15 {offsets = [0, 256], sizes = [32, 128], strides = [1, 1]} : vector<32x512xf32> to vector<32x128xf32>
    %96 = vector.extract_strided_slice %1 {offsets = [0, 256], sizes = [128, 128], strides = [1, 1]} : vector<128x512xf32> to vector<128x128xf32>
    %cst_25 = arith.constant dense<0x7F800000> : vector<32xf32>
    %97 = vector.multi_reduction <minimumf>, %95, %cst_25 [1] : vector<32x128xf32> to vector<32xf32>
    %98 = vector.shape_cast %97 : vector<32xf32> to vector<32x1xf32>
    %99 = vector.broadcast %98 : vector<32x1xf32> to vector<32x128xf32>
    %100 = arith.cmpf oeq, %95, %99 : vector<32x128xf32>
    %c128_i32_26 = arith.constant 128 : i32
    %101 = vector.shape_cast %16 : vector<1x128xi32> to vector<1x128xi32>
    %102 = vector.broadcast %101 : vector<1x128xi32> to vector<32x128xi32>
    %103 = vector.broadcast %c128_i32_26 : i32 to vector<32x128xi32>
    %104 = arith.select %100, %102, %103 : vector<32x128xi1>, vector<32x128xi32>
    %cst_27 = arith.constant dense<2147483647> : vector<32xi32>
    %105 = vector.multi_reduction <minsi>, %104, %cst_27 [1] : vector<32x128xi32> to vector<32xi32>
    %106 = vector.shape_cast %105 : vector<32xi32> to vector<32x1xi32>
    %107 = vector.broadcast %16 : vector<1x128xi32> to vector<32x128xi32>
    %108 = vector.broadcast %106 : vector<32x1xi32> to vector<32x128xi32>
    %109 = arith.cmpi eq, %107, %108 : vector<32x128xi32>
    %110 = arith.extui %109 : vector<32x128xi1> to vector<32x128xi32>
    %111 = arith.sitofp %110 : vector<32x128xi32> to vector<32x128xf32>
    %cst_28 = arith.constant dense<0.000000e+00> : vector<32x128xf32>
    %112 = tpu.matmul %111, %96, %cst_28 {dimension_numbers = #tpu.dot_dimension_numbers<[1], [1], [0], [0], [0, 0, 1, 0], [], []>} : vector<32x128xf32>, vector<128x128xf32>, vector<32x128xf32> -> vector<32x128xf32>
    %113 = arith.addf %81, %112 : vector<32x128xf32>
    %c2_i32 = arith.constant 2 : i32
    %114 = vector.broadcast %c2_i32 : i32 to vector<4x1xi32>
    %115 = arith.cmpi eq, %18, %114 : vector<4x1xi32>
    %cst_29 = arith.constant 0.000000e+00 : f32
    %116 = vector.shape_cast %115 : vector<4x1xi1> to vector<4x1xi1>
    %117 = vector.broadcast %116 : vector<4x1xi1> to vector<4x128xi1>
    %118 = vector.shape_cast %17 : vector<1x128xf32> to vector<1x128xf32>
    %119 = vector.broadcast %118 : vector<1x128xf32> to vector<4x128xf32>
    %120 = vector.broadcast %cst_29 : f32 to vector<4x128xf32>
    %121 = arith.select %117, %119, %120 : vector<4x128xi1>, vector<4x128xf32>
    %cst_30 = arith.constant dense<0.000000e+00> : vector<4x32xf32>
    %122 = tpu.matmul %121, %111, %cst_30 {dimension_numbers = #tpu.dot_dimension_numbers<[1], [1], [0], [0], [0, 0, 1, 0], [], []>} : vector<4x128xf32>, vector<32x128xf32>, vector<4x32xf32> -> vector<4x32xf32>
    %123 = arith.addf %91, %122 : vector<4x32xf32>
    %cst_31 = arith.constant dense<0.000000e+00> : vector<1x128xf32>
    %124 = tpu.matmul %26, %111, %cst_31 {dimension_numbers = #tpu.dot_dimension_numbers<[1], [0], [0], [1], [0, 0, 1, 1], [], []>} : vector<1x32xf32>, vector<32x128xf32>, vector<1x128xf32> -> vector<1x128xf32>
    %125 = arith.addf %93, %124 : vector<1x128xf32>
    %126 = arith.addf %94, %98 : vector<32x1xf32>
    %127 = vector.extract_strided_slice %15 {offsets = [0, 384], sizes = [32, 128], strides = [1, 1]} : vector<32x512xf32> to vector<32x128xf32>
    %128 = vector.extract_strided_slice %1 {offsets = [0, 384], sizes = [128, 128], strides = [1, 1]} : vector<128x512xf32> to vector<128x128xf32>
    %cst_32 = arith.constant dense<0x7F800000> : vector<32xf32>
    %129 = vector.multi_reduction <minimumf>, %127, %cst_32 [1] : vector<32x128xf32> to vector<32xf32>
    %130 = vector.shape_cast %129 : vector<32xf32> to vector<32x1xf32>
    %131 = vector.broadcast %130 : vector<32x1xf32> to vector<32x128xf32>
    %132 = arith.cmpf oeq, %127, %131 : vector<32x128xf32>
    %c128_i32_33 = arith.constant 128 : i32
    %133 = vector.shape_cast %16 : vector<1x128xi32> to vector<1x128xi32>
    %134 = vector.broadcast %133 : vector<1x128xi32> to vector<32x128xi32>
    %135 = vector.broadcast %c128_i32_33 : i32 to vector<32x128xi32>
    %136 = arith.select %132, %134, %135 : vector<32x128xi1>, vector<32x128xi32>
    %cst_34 = arith.constant dense<2147483647> : vector<32xi32>
    %137 = vector.multi_reduction <minsi>, %136, %cst_34 [1] : vector<32x128xi32> to vector<32xi32>
    %138 = vector.shape_cast %137 : vector<32xi32> to vector<32x1xi32>
    %139 = vector.broadcast %16 : vector<1x128xi32> to vector<32x128xi32>
    %140 = vector.broadcast %138 : vector<32x1xi32> to vector<32x128xi32>
    %141 = arith.cmpi eq, %139, %140 : vector<32x128xi32>
    %142 = arith.extui %141 : vector<32x128xi1> to vector<32x128xi32>
    %143 = arith.sitofp %142 : vector<32x128xi32> to vector<32x128xf32>
    %cst_35 = arith.constant dense<0.000000e+00> : vector<32x128xf32>
    %144 = tpu.matmul %143, %128, %cst_35 {dimension_numbers = #tpu.dot_dimension_numbers<[1], [1], [0], [0], [0, 0, 1, 0], [], []>} : vector<32x128xf32>, vector<128x128xf32>, vector<32x128xf32> -> vector<32x128xf32>
    %145 = arith.addf %113, %144 : vector<32x128xf32>
    %c3_i32 = arith.constant 3 : i32
    %146 = vector.broadcast %c3_i32 : i32 to vector<4x1xi32>
    %147 = arith.cmpi eq, %18, %146 : vector<4x1xi32>
    %cst_36 = arith.constant 0.000000e+00 : f32
    %148 = vector.shape_cast %147 : vector<4x1xi1> to vector<4x1xi1>
    %149 = vector.broadcast %148 : vector<4x1xi1> to vector<4x128xi1>
    %150 = vector.shape_cast %17 : vector<1x128xf32> to vector<1x128xf32>
    %151 = vector.broadcast %150 : vector<1x128xf32> to vector<4x128xf32>
    %152 = vector.broadcast %cst_36 : f32 to vector<4x128xf32>
    %153 = arith.select %149, %151, %152 : vector<4x128xi1>, vector<4x128xf32>
    %cst_37 = arith.constant dense<0.000000e+00> : vector<4x32xf32>
    %154 = tpu.matmul %153, %143, %cst_37 {dimension_numbers = #tpu.dot_dimension_numbers<[1], [1], [0], [0], [0, 0, 1, 0], [], []>} : vector<4x128xf32>, vector<32x128xf32>, vector<4x32xf32> -> vector<4x32xf32>
    %155 = arith.addf %123, %154 : vector<4x32xf32>
    %cst_38 = arith.constant dense<0.000000e+00> : vector<1x128xf32>
    %156 = tpu.matmul %26, %143, %cst_38 {dimension_numbers = #tpu.dot_dimension_numbers<[1], [0], [0], [1], [0, 0, 1, 1], [], []>} : vector<1x32xf32>, vector<32x128xf32>, vector<1x128xf32> -> vector<1x128xf32>
    %157 = arith.addf %125, %156 : vector<1x128xf32>
    %158 = arith.addf %126, %130 : vector<32x1xf32>
    %c0_39 = arith.constant 0 : index
    %c0_40 = arith.constant 0 : index
    %159 = vector.load %arg4[%c0_39, %c0_40] : memref<32x128xf32, #tpu.memory_space<vmem>>, vector<32x128xf32>
    tpu.vector_store %arg4[%c0_39, %c0_40], %145 {strides = array<i32>} : memref<32x128xf32, #tpu.memory_space<vmem>>, vector<32x128xf32>,
    %160 = arith.fptosi %155 : vector<4x32xf32> to vector<4x32xi32>
    %161 = vector.shape_cast %160 : vector<4x32xi32> to vector<1x4x32xi32>
    %c0_41 = arith.constant 0 : index
    %c0_42 = arith.constant 0 : index
    %c0_43 = arith.constant 0 : index
    %162 = vector.load %arg5[%c0_41, %c0_42, %c0_43] : memref<1x4x32xi32, #tpu.memory_space<vmem>>, vector<1x4x32xi32>
    tpu.vector_store %arg5[%c0_41, %c0_42, %c0_43], %161 {strides = array<i32>} : memref<1x4x32xi32, #tpu.memory_space<vmem>>, vector<1x4x32xi32>,
    %163 = vector.shape_cast %157 : vector<1x128xf32> to vector<1x1x128xf32>
    %c0_44 = arith.constant 0 : index
    %c0_45 = arith.constant 0 : index
    %c0_46 = arith.constant 0 : index
    %164 = vector.load %arg6[%c0_44, %c0_45, %c0_46] : memref<1x1x128xf32, #tpu.memory_space<vmem>>, vector<1x1x128xf32>
    tpu.vector_store %arg6[%c0_44, %c0_45, %c0_46], %163 {strides = array<i32>} : memref<1x1x128xf32, #tpu.memory_space<vmem>>, vector<1x1x128xf32>,
    %165 = arith.mulf %12, %12 : vector<32x128xf32>
    %cst_47 = arith.constant dense<0.000000e+00> : vector<32xf32>
    %166 = vector.multi_reduction <add>, %165, %cst_47 [1] : vector<32x128xf32> to vector<32xf32>
    %167 = vector.shape_cast %166 : vector<32xf32> to vector<32x1xf32>
    %cst_48 = arith.constant 2.000000e+00 : f32
    %168 = vector.broadcast %cst_48 : f32 to vector<32x1xf32>
    %169 = arith.mulf %168, %158 : vector<32x1xf32>
    %170 = arith.addf %167, %169 : vector<32x1xf32>
    %cst_49 = arith.constant 0.000000e+00 : f32
    %171 = vector.broadcast %cst_49 : f32 to vector<32x1xf32>
    %172 = arith.select %8, %170, %171 : vector<32x1xi1>, vector<32x1xf32>
    %173 = vector.shape_cast %172 : vector<32x1xf32> to vector<1x32x1xf32>
    %cst_50 = arith.constant dense<0.000000e+00> : vector<1xf32>
    %174 = vector.multi_reduction <add>, %173, %cst_50 [1, 2] : vector<1x32x1xf32> to vector<1xf32>
    %175 = vector.shape_cast %174 : vector<1xf32> to vector<1x1x1xf32>
    %176 = vector.extract %175[0, 0, 0] : f32 from vector<1x1x1xf32>
    %177 = vector.broadcast %176 : f32 to vector<1x1xf32>
    %178 = vector.shape_cast %177 : vector<1x1xf32> to vector<1x1x1xf32>
    %c0_51 = arith.constant 0 : index
    %c0_52 = arith.constant 0 : index
    %c0_53 = arith.constant 0 : index
    %179 = vector.load %arg7[%c0_51, %c0_52, %c0_53] : memref<1x1x1xf32, #tpu.memory_space<vmem>>, vector<1x1x1xf32>
    tpu.vector_store %arg7[%c0_51, %c0_52, %c0_53], %178 {strides = array<i32>} : memref<1x1x1xf32, #tpu.memory_space<vmem>>, vector<1x1x1xf32>,
    return
  }
  func.func @transform_0(%arg0: i32) -> (i32, i32) {
    %c0_i32 = arith.constant 0 : i32
    %c0_i32_0 = arith.constant 0 : i32
    return %arg0, %c0_i32 : i32, i32
  }
  func.func @transform_1(%arg0: i32) -> (i32, i32) {
    %c0_i32 = arith.constant 0 : i32
    %c0_i32_0 = arith.constant 0 : i32
    %c0_i32_1 = arith.constant 0 : i32
    return %c0_i32, %c0_i32_0 : i32, i32
  }
  func.func @transform_2(%arg0: i32) -> (i32, i32) {
    %c0_i32 = arith.constant 0 : i32
    %c0_i32_0 = arith.constant 0 : i32
    %c0_i32_1 = arith.constant 0 : i32
    return %c0_i32, %c0_i32_0 : i32, i32
  }
  func.func @transform_3(%arg0: i32) -> (i32, i32) {
    %c0_i32 = arith.constant 0 : i32
    %c0_i32_0 = arith.constant 0 : i32
    return %arg0, %c0_i32 : i32, i32
  }
  func.func @transform_4(%arg0: i32) -> (i32, i32, i32) {
    %c0_i32 = arith.constant 0 : i32
    %c0_i32_0 = arith.constant 0 : i32
    %c0_i32_1 = arith.constant 0 : i32
    return %arg0, %c0_i32, %c0_i32_0 : i32, i32, i32
  }
  func.func @transform_5(%arg0: i32) -> (i32, i32, i32) {
    %c0_i32 = arith.constant 0 : i32
    %c0_i32_0 = arith.constant 0 : i32
    %c0_i32_1 = arith.constant 0 : i32
    return %arg0, %c0_i32, %c0_i32_0 : i32, i32, i32
  }
  func.func @transform_6(%arg0: i32) -> (i32, i32, i32) {
    %c0_i32 = arith.constant 0 : i32
    %c0_i32_0 = arith.constant 0 : i32
    %c0_i32_1 = arith.constant 0 : i32
    return %arg0, %c0_i32, %c0_i32_0 : i32, i32, i32
  }
}

</mosaic_0001>

<llo_original>
// kernel: tpu_custom_call.1
$region0: #{tpu_custom_call.1}
  #allocation0 [shape = 'u32[]', space=smem, size = 0x4, offset = 0x4, fixed_abs, tag = 'smem constant byte address 0x4 - core index']
  #allocation1 [shape = 'u32[144,128]{1,0:T(1,128)}', space=vmem, size = 0x12000, scoped, tag = 'internal scratch']
  %s0 = inlined_call_operand.hbm [shape: f32[72,128], index: 0, kind: input, shape index: {}]
  %s1 = inlined_call_operand.hbm [shape: f32[128,512], index: 1, kind: input, shape index: {}]
  %s2 = inlined_call_operand.vmem [shape: f32[1,512], index: 2, kind: input, shape index: {}]
  %s3 = inlined_call_operand.hbm [shape: f32[72,128], index: 3, kind: output, shape index: {0}]
  %s4 = inlined_call_operand.hbm [shape: s32[3,4,32], index: 4, kind: output, shape index: {1}]
  %s5 = inlined_call_operand.hbm [shape: f32[3,1,128], index: 5, kind: output, shape index: {2}]
  %s6 = inlined_call_operand.vmem [shape: f32[3,1,1], index: 6, kind: output, shape index: {3}]
  %7 = xla_tuple %s3, %s4, %s5, %s6
  %s8 = sld [smem:[#allocation0]]
  $region77: #{tpu_custom_call.1} parent=0
    _
  %s10 = ssub.s32 1, %s8
  %s11 = scalar_select 0, %s10, %s8
  $region1: #{tpu_custom_call.1} parent=0
    #allocation2 [shape = 'u8[32768]{0}', space=vmem, size = 0x8000, scoped, tag = 'input window, operand 0']
    #allocation3 [shape = 's32[2]{0}', space=sflag, size = 0x8, scoped, tag = 'scoped memory for tpu_custom_call.1']
    #allocation4 [shape = 's32[2]{0}', space=sflag, size = 0x8, scoped, tag = 'scoped memory for tpu_custom_call.1']
    #allocation5 [shape = 'u8[262144]{0}', space=vmem, size = 0x40000, scoped, tag = 'input window, operand 1, single buffered']
    #allocation6 [shape = 's32[1]{0}', space=sflag, size = 0x4, scoped, tag = 'scoped memory for tpu_custom_call.1']
    #allocation7 [shape = 'u8[32768]{0}', space=vmem, size = 0x8000, scoped, tag = 'output window, operand 0']
    #allocation8 [shape = 'u8[4096]{0}', space=vmem, size = 0x1000, scoped, tag = 'output window, operand 1']
    #allocation9 [shape = 's32[2]{0}', space=sflag, size = 0x8, scoped, tag = 'scoped memory for tpu_custom_call.1']
    #allocation10 [shape = 'u8[1024]{0}', space=vmem, size = 0x400, scoped, tag = 'output window, operand 2']
    %12 = vsyncpa [#allocation3], 0
    %s13 = scalar_lea.sflag [#allocation3], 1
    %14 = vsyncpa %s13, 0
    %15 = vsyncpa [#allocation6], 0
    %16 = vsyncpa [#allocation4], 0
    %s17 = scalar_lea.sflag [#allocation4], 1
    %18 = vsyncpa %s17, 0
    %19 = vsyncpa [#allocation9], 0
    %s20 = scalar_lea.sflag [#allocation9], 1
    %21 = vsyncpa %s20, 0
    loop: start=0, step=1, limit=5
    $region2: #{tpu_custom_call.1} parent=1 // loop_pre_header
      _
    $region3: #{tpu_custom_call.1} parent=1 // loop_header
      %s23 = sphi 0, %s27
      %p24 = scmp.ge.s32.totalorder %s23, 5
      %s33 = sphi 0, %s35
      %s36 = sphi 0, %s33
      %s37 = sphi 0, %s36
      %s53 = sphi 0, %s37
      %s57 = sphi 0, %s57
      %s59 = sphi 0, %s57
      %s60 = sphi 0, %s59
      %s74 = sphi 0, %s60
      %s78 = sphi 0, %s78
      %s80 = sphi 0, %s78
      %s81 = sphi 0, %s80
      %s95 = sphi 0, %s81
      %s101 = sphi 0, %s103
      %s104 = sphi 0, %s101
      %s105 = sphi 0, %s104
      %s121 = sphi 0, %s105
      %s127 = sphi 0, %s129
      %s130 = sphi 0, %s127
      %s131 = sphi 0, %s130
      %s147 = sphi 0, %s131
      %s153 = sphi 0, %s155
      %s156 = sphi 0, %s153
      %s157 = sphi 0, %s156
      %s173 = sphi 0, %s157
      %s179 = sphi 0, %s181
      %s182 = sphi 0, %s179
      %s183 = sphi 0, %s182
      %s199 = sphi 0, %s183
    $region4: #{tpu_custom_call.1} parent=1 // loop_header_branch
      %26 = sbr.rel (%p24) target = $region8
    $region5: #{tpu_custom_call.1} parent=1 // loop_body
      %s28 = ssub.s32 %s23, 1
      %s29 = ssub.s32 %s23, 2
      %s30 = sadd.s32 %s23, 1
      %s31 = ssub.s32 %s23, %s30
      %p32 = scmp.eq.s32.totalorder %s31, 0
      %s34 = sadd.s32 %s33, 1
      %s35 = scalar_select %p32, %s33, %s34
      %p38 = pneg %p32
      %p39 = scmp.eq.s32.totalorder %s23, 2
      %p40 = por %p38, %p39
      %p41 = scmp.ne.s32.totalorder %s33, %s36
      %p42 = scmp.eq.s32.totalorder %s23, 0
      %p43 = por %p41, %p42
      %p44 = scmp.ne.s32.totalorder %s33, %s36
      %p45 = scmp.eq.s32.totalorder %s28, 2
      %p46 = por %p44, %p45
      %p47 = scmp.ne.s32.totalorder %s36, %s37
      %p48 = scmp.eq.s32.totalorder %s28, 0
      %p49 = por %p47, %p48
      %p50 = scmp.ne.s32.totalorder %s36, %s37
      %p51 = scmp.eq.s32.totalorder %s29, 2
      %p52 = por %p50, %p51
      %p54 = scmp.ne.s32.totalorder %s37, %s53
      %p55 = scmp.eq.s32.totalorder %s29, 0
      %p56 = por %p54, %p55
      %s58 = sadd.s32 %s57, 1
      %p61 = scmp.eq.s32.totalorder %s23, 2
      %p62 = scmp.ne.s32.totalorder %s57, %s59
      %p63 = scmp.eq.s32.totalorder %s23, 0
      %p64 = por %p62, %p63
      %p65 = scmp.ne.s32.totalorder %s57, %s59
      %p66 = scmp.eq.s32.totalorder %s28, 2
      %p67 = por %p65, %p66
      %p68 = scmp.ne.s32.totalorder %s59, %s60
      %p69 = scmp.eq.s32.totalorder %s28, 0
      %p70 = por %p68, %p69
      %p71 = scmp.ne.s32.totalorder %s59, %s60
      %p72 = scmp.eq.s32.totalorder %s29, 2
      %p73 = por %p71, %p72
      %p75 = scmp.ne.s32.totalorder %s60, %s74
      %p76 = scmp.eq.s32.totalorder %s29, 0
      %p77 = por %p75, %p76
      %s79 = sadd.s32 %s78, 1
      %p82 = scmp.eq.s32.totalorder %s23, 2
      %p83 = scmp.ne.s32.totalorder %s78, %s80
      %p84 = scmp.eq.s32.totalorder %s23, 0
      %p85 = por %p83, %p84
      %p86 = scmp.ne.s32.totalorder %s78, %s80
      %p87 = scmp.eq.s32.totalorder %s28, 2
      %p88 = por %p86, %p87
      %p89 = scmp.ne.s32.totalorder %s80, %s81
      %p90 = scmp.eq.s32.totalorder %s28, 0
      %p91 = por %p89, %p90
      %p92 = scmp.ne.s32.totalorder %s80, %s81
      %p93 = scmp.eq.s32.totalorder %s29, 2
      %p94 = por %p92, %p93
      %p96 = scmp.ne.s32.totalorder %s81, %s95
      %p97 = scmp.eq.s32.totalorder %s29, 0
      %p98 = por %p96, %p97
      %s99 = ssub.s32 %s23, %s30
      %p100 = scmp.eq.s32.totalorder %s99, 0
      %s102 = sadd.s32 %s101, 1
      %s103 = scalar_select %p100, %s101, %s102
      %p106 = pneg %p100
      %p107 = scmp.eq.s32.totalorder %s23, 2
      %p108 = por %p106, %p107
      %p109 = scmp.ne.s32.totalorder %s101, %s104
      %p110 = scmp.eq.s32.totalorder %s23, 0
      %p111 = por %p109, %p110
      %p112 = scmp.ne.s32.totalorder %s101, %s104
      %p113 = scmp.eq.s32.totalorder %s28, 2
      %p114 = por %p112, %p113
      %p115 = scmp.ne.s32.totalorder %s104, %s105
      %p116 = scmp.eq.s32.totalorder %s28, 0
      %p117 = por %p115, %p116
      %p118 = scmp.ne.s32.totalorder %s104, %s105
      %p119 = scmp.eq.s32.totalorder %s29, 2
      %p120 = por %p118, %p119
      %p122 = scmp.ne.s32.totalorder %s105, %s121
      %p123 = scmp.eq.s32.totalorder %s29, 0
      %p124 = por %p122, %p123
      %s125 = ssub.s32 %s23, %s30
      %p126 = scmp.eq.s32.totalorder %s125, 0
      %s128 = sadd.s32 %s127, 1
      %s129 = scalar_select %p126, %s127, %s128
      %p132 = pneg %p126
      %p133 = scmp.eq.s32.totalorder %s23, 2
      %p134 = por %p132, %p133
      %p135 = scmp.ne.s32.totalorder %s127, %s130
      %p136 = scmp.eq.s32.totalorder %s23, 0
      %p137 = por %p135, %p136
      %p138 = scmp.ne.s32.totalorder %s127, %s130
      %p139 = scmp.eq.s32.totalorder %s28, 2
      %p140 = por %p138, %p139
      %p141 = scmp.ne.s32.totalorder %s130, %s131
      %p142 = scmp.eq.s32.totalorder %s28, 0
      %p143 = por %p141, %p142
      %p144 = scmp.ne.s32.totalorder %s130, %s131
      %p145 = scmp.eq.s32.totalorder %s29, 2
      %p146 = por %p144, %p145
      %p148 = scmp.ne.s32.totalorder %s131, %s147
      %p149 = scmp.eq.s32.totalorder %s29, 0
      %p150 = por %p148, %p149
      %s151 = ssub.s32 %s23, %s30
      %p152 = scmp.eq.s32.totalorder %s151, 0
      %s154 = sadd.s32 %s153, 1
      %s155 = scalar_select %p152, %s153, %s154
      %p158 = pneg %p152
      %p159 = scmp.eq.s32.totalorder %s23, 2
      %p160 = por %p158, %p159
      %p161 = scmp.ne.s32.totalorder %s153, %s156
      %p162 = scmp.eq.s32.totalorder %s23, 0
      %p163 = por %p161, %p162
      %p164 = scmp.ne.s32.totalorder %s153, %s156
      %p165 = scmp.eq.s32.totalorder %s28, 2
      %p166 = por %p164, %p165
      %p167 = scmp.ne.s32.totalorder %s156, %s157
      %p168 = scmp.eq.s32.totalorder %s28, 0
      %p169 = por %p167, %p168
      %p170 = scmp.ne.s32.totalorder %s156, %s157
      %p171 = scmp.eq.s32.totalorder %s29, 2
      %p172 = por %p170, %p171
      %p174 = scmp.ne.s32.totalorder %s157, %s173
      %p175 = scmp.eq.s32.totalorder %s29, 0
      %p176 = por %p174, %p175
      %s177 = ssub.s32 %s23, %s30
      %p178 = scmp.eq.s32.totalorder %s177, 0
      %s180 = sadd.s32 %s179, 1
      %s181 = scalar_select %p178, %s179, %s180
      %p184 = pneg %p178
      %p185 = scmp.eq.s32.totalorder %s23, 2
      %p186 = por %p184, %p185
      %p187 = scmp.ne.s32.totalorder %s179, %s182
      %p188 = scmp.eq.s32.totalorder %s23, 0
      %p189 = por %p187, %p188
      %p190 = scmp.ne.s32.totalorder %s179, %s182
      %p191 = scmp.eq.s32.totalorder %s28, 2
      %p192 = por %p190, %p191
      %p193 = scmp.ne.s32.totalorder %s182, %s183
      %p194 = scmp.eq.s32.totalorder %s28, 0
      %p195 = por %p193, %p194
      %p196 = scmp.ne.s32.totalorder %s182, %s183
      %p197 = scmp.eq.s32.totalorder %s29, 2
      %p198 = por %p196, %p197
      %p200 = scmp.ne.s32.totalorder %s183, %s199
      %p201 = scmp.eq.s32.totalorder %s29, 0
      %p202 = por %p200, %p201
      %p203 = scmp.le.s32.totalorder 1, %s23
      %p204 = scmp.lt.s32.totalorder %s23, 4
      %p205 = pnand %p203, %p204
      %p206 = pneg %p205
      // Predicated region
      $region9: #{tpu_custom_call.1} parent=5 // pred_check
        _
      $region10: #{tpu_custom_call.1} parent=5 // pred_check_branch
        %208 = sbr.rel (%p205) target = $region12
      $region11: #{tpu_custom_call.1} parent=5 // pred_region
        %s209 = ssub.s32 %s23, 1
        // Predicated region
        $region13: #{tpu_custom_call.1} parent=11 // pred_check
          %p210 = pneg %p70
        $region14: #{tpu_custom_call.1} parent=11 // pred_check_branch
          %212 = sbr.rel (%p210) target = $region16
        $region15: #{tpu_custom_call.1} parent=11 // pred_region
          %s214 = ssub.s32 8192, 8192
          %215 = vsyncadd [#allocation6], %s214
          %s216 = sshll.u32 [#allocation5], 4
          %s217 = int_to_ptr.vmem [resolvable:$true] %s216
          %222 = dma.hbm_to_vmem [thread:$0]  %s1, 8192, %s217, [#allocation6], 512, 512, 32
        $region16: #{tpu_custom_call.1} parent=11 // pred_fallthru
          _
        // Predicated region
        $region17: #{tpu_custom_call.1} parent=11 // pred_check
          %p223 = pneg %p91
        $region18: #{tpu_custom_call.1} parent=11 // pred_check_branch
          %225 = sbr.rel (%p223) target = $region20
        $region19: #{tpu_custom_call.1} parent=11 // pred_region
          _
        $region20: #{tpu_custom_call.1} parent=11 // pred_fallthru
          _
      $region12: #{tpu_custom_call.1} parent=5 // pred_fallthru
        _
      %p226 = scmp.lt.s32.totalorder %s23, 3
      // Predicated region
      $region21: #{tpu_custom_call.1} parent=5 // pred_check
        %p227 = pneg %p226
      $region22: #{tpu_custom_call.1} parent=5 // pred_check_branch
        %229 = sbr.rel (%p227) target = $region24
      $region23: #{tpu_custom_call.1} parent=5 // pred_region
        // Predicated region
        $region25: #{tpu_custom_call.1} parent=23 // pred_check
          %p230 = pneg %p43
        $region26: #{tpu_custom_call.1} parent=23 // pred_check_branch
          %232 = sbr.rel (%p230) target = $region28
        $region27: #{tpu_custom_call.1} parent=23 // pred_region
          %s233 = sand.u32 %s33, 1
          %s234 = scalar_lea.sflag [#allocation3], %s233
          %s235 = sand.u32 %s33, 1
          %s236 = smul.addr %s235, 32
          %s237 = scalar_lea.vmem [#allocation2], %s236
          %s238 = smul.u32 4, %s23
          %s239 = ssub.s32 9, %s238
          %p240 = scmp.lt.s32.totalorder %s239, 4
          %s241 = scalar_select %p240, %s239, 4
          %s242 = smul.u32 128, %s241
          %s244 = ssub.s32 512, %s242
          %245 = vsyncadd %s234, %s244
          %p246 = scmp.ne.s32.totalorder 0, %s242
          %s247 = smul.addr %s238, 128
          %s248 = scalar_lea.hbm %s0, %s247
          %s249 = smul.u32 8, %s241
          %s250 = sshll.u32 %s237, 4
          %s251 = int_to_ptr.vmem [resolvable:$true] %s250
          %s252 = sshll.u32 %s249, 4
          %256 = dma.hbm_to_vmem [thread:$0]  (%p246), %s248, %s252, %s251, %s234, 128, 128, 8
        $region28: #{tpu_custom_call.1} parent=23 // pred_fallthru
          _
      $region24: #{tpu_custom_call.1} parent=5 // pred_fallthru
        _
      %p257 = scmp.le.s32.totalorder 1, %s23
      %p258 = scmp.lt.s32.totalorder %s23, 4
      %p259 = pnand %p257, %p258
      %p260 = pneg %p259
      // Predicated region
      $region29: #{tpu_custom_call.1} parent=5 // pred_check
        _
      $region30: #{tpu_custom_call.1} parent=5 // pred_check_branch
        %262 = sbr.rel (%p259) target = $region32
      $region31: #{tpu_custom_call.1} parent=5 // pred_region
        %s263 = ssub.s32 %s23, 1
        %s264 = sand.u32 %s36, 1
        %s265 = scalar_lea.sflag [#allocation3], %s264
        %s266 = sand.u32 %s36, 1
        %s267 = smul.addr %s266, 32
        %s268 = scalar_lea.vmem [#allocation2], %s267
        // Predicated region
        $region33: #{tpu_custom_call.1} parent=31 // pred_check
          %p269 = pneg %p49
        $region34: #{tpu_custom_call.1} parent=31 // pred_check_branch
          %271 = sbr.rel (%p269) target = $region36
        $region35: #{tpu_custom_call.1} parent=31 // pred_region
          %272 = dma.done %s265, 512
        $region36: #{tpu_custom_call.1} parent=31 // pred_fallthru
          _
        // Predicated region
        $region37: #{tpu_custom_call.1} parent=31 // pred_check
          %p273 = pneg %p70
        $region38: #{tpu_custom_call.1} parent=31 // pred_check_branch
          %275 = sbr.rel (%p273) target = $region40
        $region39: #{tpu_custom_call.1} parent=31 // pred_region
          %276 = dma.done [#allocation6], 8192
        $region40: #{tpu_custom_call.1} parent=31 // pred_fallthru
          _
        %s277 = sand.u32 %s36, 1
        %s278 = scalar_lea.sflag [#allocation3], %s277
        %s279 = sand.u32 %s36, 1
        %s280 = smul.addr %s279, 32
        %s281 = scalar_lea.vmem [#allocation2], %s280
        %p282 = pneg %p49
        %p283 = pneg %p46
        %p284 = pneg %p70
        %p285 = pneg %p67
        %p286 = pneg %p91
        %p287 = pneg %p88
        %p288 = pneg %p117
        %p289 = pneg %p114
        %s290 = sand.u32 %s104, 1
        %s291 = scalar_lea.sflag [#allocation4], %s290
        %s292 = sand.u32 %s104, 1
        %s293 = smul.addr %s292, 32
        %s294 = scalar_lea.vmem [#allocation7], %s293
        %p295 = pneg %p143
        %p296 = pneg %p140
        %s297 = sand.u32 %s28, 1
        %s298 = scalar_lea.sflag [#allocation9], %s297
        %s299 = sand.u32 %s130, 1
        %s300 = smul.addr %s299, 4
        %s301 = scalar_lea.vmem [#allocation8], %s300
        %p302 = pneg %p169
        %p303 = pneg %p166
        %s304 = sand.u32 %s28, 1
        %s305 = scalar_lea.sflag [#allocation9], %s304
        %s306 = sand.u32 %s156, 1
        %s307 = scalar_lea.vmem [#allocation10], %s306
        %p308 = pneg %p195
        %p309 = pneg %p192
        %p310 = scmp.lt.s32.totalorder %s28, 2
        %s311 = scalar_select %p310, %s28, 2
        %s312 = scalar_lea.vmem %s6, %s311
        %s313 = smul.u32 4, %s28
        %s314 = ssub.s32 9, %s313
        %p315 = scmp.lt.s32.totalorder %s314, 4
        %s316 = scalar_select %p315, %s314, 4
        %s317 = smul.u32 128, %s316
        %s318 = smul.u32 4, %s28
        %s319 = ssub.s32 9, %s318
        %p320 = scmp.lt.s32.totalorder %s319, 4
        %s321 = scalar_select %p320, %s319, 4
        %s322 = smul.u32 128, %s321
        %p323 = scmp.lt.s32.totalorder %s28, 2
        %s324 = scalar_select %p323, %s28, 2
        %s325 = scalar_lea.vmem %s6, %s324
        %v326 = vld [vmem:[%s268] sm:$0xff]
        %v327 = vld [vmem:[%s268 + $0x8] sm:$0xff]
        %v328 = vld [vmem:[%s268 + $0x10] sm:$0xff]
        %v329 = vld [vmem:[%s268 + $0x18] sm:$0xff]
        %v330 = vld [vmem:[#allocation5] sm:$0xff]
        %v331 = vld [vmem:[#allocation5 + $0x8] sm:$0xff]
        %v332 = vld [vmem:[#allocation5 + $0x10] sm:$0xff]
        %v333 = vld [vmem:[#allocation5 + $0x18] sm:$0xff]
        %v334 = vld [vmem:[#allocation5 + $0x20] sm:$0xff]
        %v335 = vld [vmem:[#allocation5 + $0x28] sm:$0xff]
        %v336 = vld [vmem:[#allocation5 + $0x30] sm:$0xff]
        %v337 = vld [vmem:[#allocation5 + $0x38] sm:$0xff]
        %v338 = vld [vmem:[#allocation5 + $0x40] sm:$0xff]
        %v339 = vld [vmem:[#allocation5 + $0x48] sm:$0xff]
        %v340 = vld [vmem:[#allocation5 + $0x50] sm:$0xff]
        %v341 = vld [vmem:[#allocation5 + $0x58] sm:$0xff]
        %v342 = vld [vmem:[#allocation5 + $0x60] sm:$0xff]
        %v343 = vld [vmem:[#allocation5 + $0x68] sm:$0xff]
        %v344 = vld [vmem:[#allocation5 + $0x70] sm:$0xff]
        %v345 = vld [vmem:[#allocation5 + $0x78] sm:$0xff]
        %v346 = vld [vmem:[#allocation5 + $0x80] sm:$0xff]
        %v347 = vld [vmem:[#allocation5 + $0x88] sm:$0xff]
        %v348 = vld [vmem:[#allocation5 + $0x90] sm:$0xff]
        %v349 = vld [vmem:[#allocation5 + $0x98] sm:$0xff]
        %v350 = vld [vmem:[#allocation5 + $0xa0] sm:$0xff]
        %v351 = vld [vmem:[#allocation5 + $0xa8] sm:$0xff]
        %v352 = vld [vmem:[#allocation5 + $0xb0] sm:$0xff]
        %v353 = vld [vmem:[#allocation5 + $0xb8] sm:$0xff]
        %v354 = vld [vmem:[#allocation5 + $0xc0] sm:$0xff]
        %v355 = vld [vmem:[#allocation5 + $0xc8] sm:$0xff]
        %v356 = vld [vmem:[#allocation5 + $0xd0] sm:$0xff]
        %v357 = vld [vmem:[#allocation5 + $0xd8] sm:$0xff]
        %v358 = vld [vmem:[#allocation5 + $0xe0] sm:$0xff]
        %v359 = vld [vmem:[#allocation5 + $0xe8] sm:$0xff]
        %v360 = vld [vmem:[#allocation5 + $0xf0] sm:$0xff]
        %v361 = vld [vmem:[#allocation5 + $0xf8] sm:$0xff]
        %v362 = vld [vmem:[#allocation5 + $0x100] sm:$0xff]
        %v363 = vld [vmem:[#allocation5 + $0x108] sm:$0xff]
        %v364 = vld [vmem:[#allocation5 + $0x110] sm:$0xff]
        %v365 = vld [vmem:[#allocation5 + $0x118] sm:$0xff]
        %v366 = vld [vmem:[#allocation5 + $0x120] sm:$0xff]
        %v367 = vld [vmem:[#allocation5 + $0x128] sm:$0xff]
        %v368 = vld [vmem:[#allocation5 + $0x130] sm:$0xff]
        %v369 = vld [vmem:[#allocation5 + $0x138] sm:$0xff]
        %v370 = vld [vmem:[#allocation5 + $0x140] sm:$0xff]
        %v371 = vld [vmem:[#allocation5 + $0x148] sm:$0xff]
        %v372 = vld [vmem:[#allocation5 + $0x150] sm:$0xff]
        %v373 = vld [vmem:[#allocation5 + $0x158] sm:$0xff]
        %v374 = vld [vmem:[#allocation5 + $0x160] sm:$0xff]
        %v375 = vld [vmem:[#allocation5 + $0x168] sm:$0xff]
        %v376 = vld [vmem:[#allocation5 + $0x170] sm:$0xff]
        %v377 = vld [vmem:[#allocation5 + $0x178] sm:$0xff]
        %v378 = vld [vmem:[#allocation5 + $0x180] sm:$0xff]
        %v379 = vld [vmem:[#allocation5 + $0x188] sm:$0xff]
        %v380 = vld [vmem:[#allocation5 + $0x190] sm:$0xff]
        %v381 = vld [vmem:[#allocation5 + $0x198] sm:$0xff]
        %v382 = vld [vmem:[#allocation5 + $0x1a0] sm:$0xff]
        %v383 = vld [vmem:[#allocation5 + $0x1a8] sm:$0xff]
        %v384 = vld [vmem:[#allocation5 + $0x1b0] sm:$0xff]
        %v385 = vld [vmem:[#allocation5 + $0x1b8] sm:$0xff]
        %v386 = vld [vmem:[#allocation5 + $0x1c0] sm:$0xff]
        %v387 = vld [vmem:[#allocation5 + $0x1c8] sm:$0xff]
        %v388 = vld [vmem:[#allocation5 + $0x1d0] sm:$0xff]
        %v389 = vld [vmem:[#allocation5 + $0x1d8] sm:$0xff]
        %v390 = vld [vmem:[#allocation5 + $0x1e0] sm:$0xff]
        %v391 = vld [vmem:[#allocation5 + $0x1e8] sm:$0xff]
        %v392 = vld [vmem:[#allocation5 + $0x1f0] sm:$0xff]
        %v393 = vld [vmem:[#allocation5 + $0x1f8] sm:$0xff]
        %v394 = vld [vmem:[%s2] sm:$0xf]
        %s395 = smul.u32 %s28, 32
        %v396 = vlaneseq
        %v397 = vshrl.u32 %v396, 7
        %v398 = vadd.s32 %v397, 8
        %v399 = vadd.s32 %v397, 16
        %v400 = vadd.s32 %v397, 24
        %v401 = vstv %s395
        %v402 = vadd.s32 %v401, %v397
        %v403 = vadd.s32 %v401, %v398
        %v404 = vadd.s32 %v401, %v399
        %v405 = vadd.s32 %v401, %v400
        %vm406 = vcmp.lt.s32.totalorder %v402, 72
        %vm407 = vcmp.lt.s32.totalorder %v403, 72
        %vm408 = vcmp.lt.s32.totalorder %v404, 72
        %vm409 = vcmp.lt.s32.totalorder %v405, 72
        %v410 = vsel %vm406, 1, 0
        %v411 = vsel %vm407, 1, 0
        %v412 = vsel %vm408, 1, 0
        %v413 = vsel %vm409, 1, 0
        %vm414 = vcmp.eq.s32.totalorder %v410, 1
        %vm415 = vcmp.eq.s32.totalorder %v411, 1
        %vm416 = vcmp.eq.s32.totalorder %v412, 1
        %vm417 = vcmp.eq.s32.totalorder %v413, 1
        %v418 = vsel %vm414, %v326, 0.0
        %v419 = vsel %vm415, %v327, 0.0
        %v420 = vsel %vm416, %v328, 0.0
        %v421 = vsel %vm417, %v329, 0.0
        %422 = vmatprep.subr.mxu0 %v331
        %423 = vmatpush1.msra.mxu0 %v330
        %424 = vmatprep.subr.mxu0 %v335
        %425 = vmatpush1.msra.mxu0 %v334
        %426 = vmatprep.subr.mxu0 %v339
        %427 = vmatpush1.msra.mxu0 %v338
        %428 = vmatprep.subr.mxu0 %v343
        %429 = vmatpush1.msra.mxu0 %v342
        %430 = vmatprep.subr.mxu0 %v347
        %431 = vmatpush1.msra.mxu0 %v346
        %432 = vmatprep.subr.mxu0 %v351
        %433 = vmatpush1.msra.mxu0 %v350
        %434 = vmatprep.subr.mxu0 %v355
        %435 = vmatpush1.msra.mxu0 %v354
        %436 = vmatprep.subr.mxu0 %v359
        %437 = vmatpush1.msra.mxu0 %v358
        %438 = vmatprep.subr.mxu0 %v363
        %439 = vmatpush1.msra.mxu0 %v362
        %440 = vmatprep.subr.mxu0 %v367
        %441 = vmatpush1.msra.mxu0 %v366
        %442 = vmatprep.subr.mxu0 %v371
        %443 = vmatpush1.msra.mxu0 %v370
        %444 = vmatprep.subr.mxu0 %v375
        %445 = vmatpush1.msra.mxu0 %v374
        %446 = vmatprep.subr.mxu0 %v379
        %447 = vmatpush1.msra.mxu0 %v378
        %448 = vmatprep.subr.mxu0 %v383
        %449 = vmatpush1.msra.mxu0 %v382
        %450 = vmatprep.subr.mxu0 %v387
        %451 = vmatpush1.msra.mxu0 %v386
        %452 = vmatprep.subr.mxu0 %v391
        %453 = vmatpush1.msra.mxu0 %v390
        %454 = vmatprep.subr.mxu0 0.0
        %455 = vmatpush1.msra.mxu0 0.0
        %456 = vmatprep.subr.mxu0 0.0
        %457 = vmatpush1.msra.mxu0 0.0
        %458 = vmatprep.subr.mxu0 0.0
        %459 = vmatpush1.msra.mxu0 0.0
        %460 = vmatprep.subr.mxu0 0.0
        %461 = vmatpush1.msra.mxu0 0.0
        %462 = vmatprep.subr.mxu0 0.0
        %463 = vmatpush1.msra.mxu0 0.0
        %464 = vmatprep.subr.mxu0 0.0
        %465 = vmatpush1.msra.mxu0 0.0
        %466 = vmatprep.subr.mxu0 0.0
        %467 = vmatpush1.msra.mxu0 0.0
        %468 = vmatprep.subr.mxu0 0.0
        %469 = vmatpush1.msra.mxu0 0.0
        %470 = vmatprep.subr.mxu0 0.0
        %471 = vmatpush1.msra.mxu0 0.0
        %472 = vmatprep.subr.mxu0 0.0
        %473 = vmatpush1.msra.mxu0 0.0
        %474 = vmatprep.subr.mxu0 0.0
        %475 = vmatpush1.msra.mxu0 0.0
        %476 = vmatprep.subr.mxu0 0.0
        %477 = vmatpush1.msra.mxu0 0.0
        %478 = vmatprep.subr.mxu0 0.0
        %479 = vmatpush1.msra.mxu0 0.0
        %480 = vmatprep.subr.mxu0 0.0
        %481 = vmatpush1.msra.mxu0 0.0
        %482 = vmatprep.subr.mxu0 0.0
        %483 = vmatpush1.msra.mxu0 0.0
        %484 = vmatprep.subr.mxu0 0.0
        %485 = vmatpush1.msra.mxu0 0.0
        %486 = vmatprep.mubr.f32.mxu0 0.0
        %487 = vmatmul.mubr.f32.gmra.mrb[0].mxu0 %v418
        %v488 = vpop.f32.mrb[0].mxu0
        %v489 = vadd.f32 0.0, %v488
        %v490 = vpop.f32.mrb[0].mxu0
        %v491 = vadd.f32 0.0, %v490
        %492 = vmatprep.mubr.f32.mxu0 0.0
        %493 = vmatmul.mubr.f32.gmra.mrb[0].mxu0 %v419
        %v494 = vpop.f32.mrb[0].mxu0
        %v495 = vadd.f32 0.0, %v494
        %v496 = vpop.f32.mrb[0].mxu0
        %v497 = vadd.f32 0.0, %v496
        %498 = vmatprep.mubr.f32.mxu0 0.0
        %499 = vmatmul.mubr.f32.gmra.mrb[0].mxu0 %v420
        %v500 = vpop.f32.mrb[0].mxu0
        %v501 = vadd.f32 0.0, %v500
        %v502 = vpop.f32.mrb[0].mxu0
        %v503 = vadd.f32 0.0, %v502
        %504 = vmatprep.mubr.f32.mxu0 0.0
        %505 = vmatmul.mubr.f32.gmra.mrb[0].mxu0 %v421
        %v506 = vpop.f32.mrb[0].mxu0
        %v507 = vadd.f32 0.0, %v506
        %v508 = vpop.f32.mrb[0].mxu0
        %v509 = vadd.f32 0.0, %v508
        %510 = vdwg.mxu0
        %511 = vmatprep.subr.mxu0 %v333
        %512 = vmatpush1.msra.mxu0 %v332
        %513 = vmatprep.subr.mxu0 %v337
        %514 = vmatpush1.msra.mxu0 %v336
        %515 = vmatprep.subr.mxu0 %v341
        %516 = vmatpush1.msra.mxu0 %v340
        %517 = vmatprep.subr.mxu0 %v345
        %518 = vmatpush1.msra.mxu0 %v344
        %519 = vmatprep.subr.mxu0 %v349
        %520 = vmatpush1.msra.mxu0 %v348
        %521 = vmatprep.subr.mxu0 %v353
        %522 = vmatpush1.msra.mxu0 %v352
        %523 = vmatprep.subr.mxu0 %v357
        %524 = vmatpush1.msra.mxu0 %v356
        %525 = vmatprep.subr.mxu0 %v361
        %526 = vmatpush1.msra.mxu0 %v360
        %527 = vmatprep.subr.mxu0 %v365
        %528 = vmatpush1.msra.mxu0 %v364
        %529 = vmatprep.subr.mxu0 %v369
        %530 = vmatpush1.msra.mxu0 %v368
        %531 = vmatprep.subr.mxu0 %v373
        %532 = vmatpush1.msra.mxu0 %v372
        %533 = vmatprep.subr.mxu0 %v377
        %534 = vmatpush1.msra.mxu0 %v376
        %535 = vmatprep.subr.mxu0 %v381
        %536 = vmatpush1.msra.mxu0 %v380
        %537 = vmatprep.subr.mxu0 %v385
        %538 = vmatpush1.msra.mxu0 %v384
        %539 = vmatprep.subr.mxu0 %v389
        %540 = vmatpush1.msra.mxu0 %v388
        %541 = vmatprep.subr.mxu0 %v393
        %542 = vmatpush1.msra.mxu0 %v392
        %543 = vmatprep.subr.mxu0 0.0
        %544 = vmatpush1.msra.mxu0 0.0
        %545 = vmatprep.subr.mxu0 0.0
        %546 = vmatpush1.msra.mxu0 0.0
        %547 = vmatprep.subr.mxu0 0.0
        %548 = vmatpush1.msra.mxu0 0.0
        %549 = vmatprep.subr.mxu0 0.0
        %550 = vmatpush1.msra.mxu0 0.0
        %551 = vmatprep.subr.mxu0 0.0
        %552 = vmatpush1.msra.mxu0 0.0
        %553 = vmatprep.subr.mxu0 0.0
        %554 = vmatpush1.msra.mxu0 0.0
        %555 = vmatprep.subr.mxu0 0.0
        %556 = vmatpush1.msra.mxu0 0.0
        %557 = vmatprep.subr.mxu0 0.0
        %558 = vmatpush1.msra.mxu0 0.0
        %559 = vmatprep.subr.mxu0 0.0
        %560 = vmatpush1.msra.mxu0 0.0
        %561 = vmatprep.subr.mxu0 0.0
        %562 = vmatpush1.msra.mxu0 0.0
        %563 = vmatprep.subr.mxu0 0.0
        %564 = vmatpush1.msra.mxu0 0.0
        %565 = vmatprep.subr.mxu0 0.0
        %566 = vmatpush1.msra.mxu0 0.0
        %567 = vmatprep.subr.mxu0 0.0
        %568 = vmatpush1.msra.mxu0 0.0
        %569 = vmatprep.subr.mxu0 0.0
        %570 = vmatpush1.msra.mxu0 0.0
        %571 = vmatprep.subr.mxu0 0.0
        %572 = vmatpush1.msra.mxu0 0.0
        %573 = vmatprep.subr.mxu0 0.0
        %574 = vmatpush1.msra.mxu0 0.0
        %575 = vmatprep.mubr.f32.mxu0 0.0
        %576 = vmatmul.mubr.f32.gmra.mrb[0].mxu0 %v418
        %v577 = vpop.f32.mrb[0].mxu0
        %v578 = vadd.f32 0.0, %v577
        %v579 = vpop.f32.mrb[0].mxu0
        %v580 = vadd.f32 0.0, %v579
        %581 = vmatprep.mubr.f32.mxu0 0.0
        %582 = vmatmul.mubr.f32.gmra.mrb[0].mxu0 %v419
        %v583 = vpop.f32.mrb[0].mxu0
        %v584 = vadd.f32 0.0, %v583
        %v585 = vpop.f32.mrb[0].mxu0
        %v586 = vadd.f32 0.0, %v585
        %587 = vmatprep.mubr.f32.mxu0 0.0
        %588 = vmatmul.mubr.f32.gmra.mrb[0].mxu0 %v420
        %v589 = vpop.f32.mrb[0].mxu0
        %v590 = vadd.f32 0.0, %v589
        %v591 = vpop.f32.mrb[0].mxu0
        %v592 = vadd.f32 0.0, %v591
        %593 = vmatprep.mubr.f32.mxu0 0.0
        %594 = vmatmul.mubr.f32.gmra.mrb[0].mxu0 %v421
        %v595 = vpop.f32.mrb[0].mxu0
        %v596 = vadd.f32 0.0, %v595
        %v597 = vpop.f32.mrb[0].mxu0
        %v598 = vadd.f32 0.0, %v597
        %599 = vdwg.mxu0
        %v601 = vlaneseq
        %v602 = vshrl.u32 %v601, 7
        %v603 = vsub.s32 0, %v602
        %v604 = vrot.slane %v394, %v603
        %v605 = vlaneseq
        %v606 = vshrl.u32 %v605, 7
        %v607 = vsub.s32 1, %v606
        %v608 = vrot.slane %v394, %v607
        %v609 = vlaneseq
        %v610 = vshrl.u32 %v609, 7
        %v611 = vsub.s32 2, %v610
        %v612 = vrot.slane %v394, %v611
        %v613 = vlaneseq
        %v614 = vshrl.u32 %v613, 7
        %v615 = vsub.s32 3, %v614
        %v616 = vrot.slane %v394, %v615
        %v621 = vsub.f32 %v604, %v489
        %v622 = vsub.f32 %v608, %v491
        %v623 = vsub.f32 %v612, %v578
        %v624 = vsub.f32 %v616, %v580
        %v625 = vsub.f32 %v604, %v495
        %v626 = vsub.f32 %v608, %v497
        %v627 = vsub.f32 %v612, %v584
        %v628 = vsub.f32 %v616, %v586
        %v629 = vsub.f32 %v604, %v501
        %v630 = vsub.f32 %v608, %v503
        %v631 = vsub.f32 %v612, %v590
        %v632 = vsub.f32 %v616, %v592
        %v633 = vsub.f32 %v604, %v507
        %v634 = vsub.f32 %v608, %v509
        %v635 = vsub.f32 %v612, %v596
        %v636 = vsub.f32 %v616, %v598
        %v637 = vlaneseq
        %v638 = vand.u32 %v637, 127
        %v639 = vcvt.s32.f32 %v638
        %v640 = vadd.s32 %v401, %v638
        %vm641 = vcmp.lt.s32.totalorder %v640, 72
        %v642 = vsel %vm641, 1, 0
        %v643 = vcvt.s32.f32 %v642
        %644 = vmin.xlane.f32.xlu0 %v621
        %v645 = vpop.xlane.xlu0 %644
        %646 = vmin.xlane.f32.xlu0 %v625
        %v647 = vpop.xlane.xlu0 %646
        %648 = vmin.xlane.f32.xlu0 %v629
        %v649 = vpop.xlane.xlu0 %648
        %650 = vmin.xlane.f32.xlu0 %v633
        %v651 = vpop.xlane.xlu0 %650
        %vm652 = vcmp.eq.f32.partialorder %v621, %v645
        %vm653 = vcmp.eq.f32.partialorder %v625, %v647
        %vm654 = vcmp.eq.f32.partialorder %v629, %v649
        %vm655 = vcmp.eq.f32.partialorder %v633, %v651
        %v656 = vsel %vm652, %v638, 128
        %v657 = vsel %vm653, %v638, 128
        %v658 = vsel %vm654, %v638, 128
        %v659 = vsel %vm655, %v638, 128
        %v660 = vand.u32 %v656, 65535
        %v661 = vshra.s32 %v656, 16
        %v662 = vcvt.s32.f32 %v660
        %v663 = vcvt.s32.f32 %v661
        %664 = vmin.xlane.f32.xlu0 %v663
        %v665 = vpop.xlane.xlu0 %664
        %vm666 = vcmp.eq.f32.partialorder %v663, %v665
        %v667 = vsel %vm666, %v662, inf
        %668 = vmin.xlane.f32.xlu0 %v667
        %v669 = vpop.xlane.xlu0 %668
        %v670 = vcvt.f32.s32 %v669
        %v671 = vcvt.f32.s32 %v665
        %v672 = vshll.u32 %v671, 16
        %v673 = vadd.s32 %v672, %v670
        %v674 = vand.u32 %v657, 65535
        %v675 = vshra.s32 %v657, 16
        %v676 = vcvt.s32.f32 %v674
        %v677 = vcvt.s32.f32 %v675
        %678 = vmin.xlane.f32.xlu0 %v677
        %v679 = vpop.xlane.xlu0 %678
        %vm680 = vcmp.eq.f32.partialorder %v677, %v679
        %v681 = vsel %vm680, %v676, inf
        %682 = vmin.xlane.f32.xlu0 %v681
        %v683 = vpop.xlane.xlu0 %682
        %v684 = vcvt.f32.s32 %v683
        %v685 = vcvt.f32.s32 %v679
        %v686 = vshll.u32 %v685, 16
        %v687 = vadd.s32 %v686, %v684
        %v688 = vand.u32 %v658, 65535
        %v689 = vshra.s32 %v658, 16
        %v690 = vcvt.s32.f32 %v688
        %v691 = vcvt.s32.f32 %v689
        %692 = vmin.xlane.f32.xlu0 %v691
        %v693 = vpop.xlane.xlu0 %692
        %vm694 = vcmp.eq.f32.partialorder %v691, %v693
        %v695 = vsel %vm694, %v690, inf
        %696 = vmin.xlane.f32.xlu0 %v695
        %v697 = vpop.xlane.xlu0 %696
        %v698 = vcvt.f32.s32 %v697
        %v699 = vcvt.f32.s32 %v693
        %v700 = vshll.u32 %v699, 16
        %v701 = vadd.s32 %v700, %v698
        %v702 = vand.u32 %v659, 65535
        %v703 = vshra.s32 %v659, 16
        %v704 = vcvt.s32.f32 %v702
        %v705 = vcvt.s32.f32 %v703
        %706 = vmin.xlane.f32.xlu0 %v705
        %v707 = vpop.xlane.xlu0 %706
        %vm708 = vcmp.eq.f32.partialorder %v705, %v707
        %v709 = vsel %vm708, %v704, inf
        %710 = vmin.xlane.f32.xlu0 %v709
        %v711 = vpop.xlane.xlu0 %710
        %v712 = vcvt.f32.s32 %v711
        %v713 = vcvt.f32.s32 %v707
        %v714 = vshll.u32 %v713, 16
        %v715 = vadd.s32 %v714, %v712
        %vm716 = vcmp.eq.s32.totalorder %v638, %v673
        %vm717 = vcmp.eq.s32.totalorder %v638, %v687
        %vm718 = vcmp.eq.s32.totalorder %v638, %v701
        %vm719 = vcmp.eq.s32.totalorder %v638, %v715
        %v720 = vsel %vm716, 1, 0
        %v721 = vsel %vm717, 1, 0
        %v722 = vsel %vm718, 1, 0
        %v723 = vsel %vm719, 1, 0
        %v724 = vcvt.s32.f32 %v720
        %v725 = vcvt.s32.f32 %v721
        %v726 = vcvt.s32.f32 %v722
        %v727 = vcvt.s32.f32 %v723
        %vm728 = vcmp.eq.s32.totalorder %v397, 0
        %v729 = vsel %vm728, 1, 0
        %vm730 = vcmp.eq.s32.totalorder %v729, 1
        %v731 = vsel %vm730, %v639, 0.0
        %v732 = vadd.f32 %v645, 0.0
        %v733 = vadd.f32 %v647, 0.0
        %v734 = vadd.f32 %v649, 0.0
        %v735 = vadd.f32 %v651, 0.0
        %736 = vmin.xlane.f32.xlu0 %v622
        %v737 = vpop.xlane.xlu0 %736
        %738 = vmin.xlane.f32.xlu0 %v626
        %v739 = vpop.xlane.xlu0 %738
        %740 = vmin.xlane.f32.xlu0 %v630
        %v741 = vpop.xlane.xlu0 %740
        %742 = vmin.xlane.f32.xlu0 %v634
        %v743 = vpop.xlane.xlu0 %742
        %vm744 = vcmp.eq.f32.partialorder %v622, %v737
        %vm745 = vcmp.eq.f32.partialorder %v626, %v739
        %vm746 = vcmp.eq.f32.partialorder %v630, %v741
        %vm747 = vcmp.eq.f32.partialorder %v634, %v743
        %v748 = vsel %vm744, %v638, 128
        %v749 = vsel %vm745, %v638, 128
        %v750 = vsel %vm746, %v638, 128
        %v751 = vsel %vm747, %v638, 128
        %v752 = vand.u32 %v748, 65535
        %v753 = vshra.s32 %v748, 16
        %v754 = vcvt.s32.f32 %v752
        %v755 = vcvt.s32.f32 %v753
        %756 = vmin.xlane.f32.xlu0 %v755
        %v757 = vpop.xlane.xlu0 %756
        %vm758 = vcmp.eq.f32.partialorder %v755, %v757
        %v759 = vsel %vm758, %v754, inf
        %760 = vmin.xlane.f32.xlu0 %v759
        %v761 = vpop.xlane.xlu0 %760
        %v762 = vcvt.f32.s32 %v761
        %v763 = vcvt.f32.s32 %v757
        %v764 = vshll.u32 %v763, 16
        %v765 = vadd.s32 %v764, %v762
        %v766 = vand.u32 %v749, 65535
        %v767 = vshra.s32 %v749, 16
        %v768 = vcvt.s32.f32 %v766
        %v769 = vcvt.s32.f32 %v767
        %770 = vmin.xlane.f32.xlu0 %v769
        %v771 = vpop.xlane.xlu0 %770
        %vm772 = vcmp.eq.f32.partialorder %v769, %v771
        %v773 = vsel %vm772, %v768, inf
        %774 = vmin.xlane.f32.xlu0 %v773
        %v775 = vpop.xlane.xlu0 %774
        %v776 = vcvt.f32.s32 %v775
        %v777 = vcvt.f32.s32 %v771
        %v778 = vshll.u32 %v777, 16
        %v779 = vadd.s32 %v778, %v776
        %v780 = vand.u32 %v750, 65535
        %v781 = vshra.s32 %v750, 16
        %v782 = vcvt.s32.f32 %v780
        %v783 = vcvt.s32.f32 %v781
        %784 = vmin.xlane.f32.xlu0 %v783
        %v785 = vpop.xlane.xlu0 %784
        %vm786 = vcmp.eq.f32.partialorder %v783, %v785
        %v787 = vsel %vm786, %v782, inf
        %788 = vmin.xlane.f32.xlu0 %v787
        %v789 = vpop.xlane.xlu0 %788
        %v790 = vcvt.f32.s32 %v789
        %v791 = vcvt.f32.s32 %v785
        %v792 = vshll.u32 %v791, 16
        %v793 = vadd.s32 %v792, %v790
        %v794 = vand.u32 %v751, 65535
        %v795 = vshra.s32 %v751, 16
        %v796 = vcvt.s32.f32 %v794
        %v797 = vcvt.s32.f32 %v795
        %798 = vmin.xlane.f32.xlu0 %v797
        %v799 = vpop.xlane.xlu0 %798
        %vm800 = vcmp.eq.f32.partialorder %v797, %v799
        %v801 = vsel %vm800, %v796, inf
        %802 = vmin.xlane.f32.xlu0 %v801
        %v803 = vpop.xlane.xlu0 %802
        %v804 = vcvt.f32.s32 %v803
        %v805 = vcvt.f32.s32 %v799
        %v806 = vshll.u32 %v805, 16
        %v807 = vadd.s32 %v806, %v804
        %vm808 = vcmp.eq.s32.totalorder %v638, %v765
        %vm809 = vcmp.eq.s32.totalorder %v638, %v779
        %vm810 = vcmp.eq.s32.totalorder %v638, %v793
        %vm811 = vcmp.eq.s32.totalorder %v638, %v807
        %v812 = vsel %vm808, 1, 0
        %v813 = vsel %vm809, 1, 0
        %v814 = vsel %vm810, 1, 0
        %v815 = vsel %vm811, 1, 0
        %v816 = vcvt.s32.f32 %v812
        %v817 = vcvt.s32.f32 %v813
        %v818 = vcvt.s32.f32 %v814
        %v819 = vcvt.s32.f32 %v815
        %820 = vmatprep.subr.mxu0 0.0
        %821 = vmatpush1.xpose.msra.mxu0 %v331
        %822 = vmatprep.subr.mxu0 0.0
        %823 = vmatpush1.xpose.msra.mxu0 %v335
        %824 = vmatprep.subr.mxu0 0.0
        %825 = vmatpush1.xpose.msra.mxu0 %v339
        %826 = vmatprep.subr.mxu0 0.0
        %827 = vmatpush1.xpose.msra.mxu0 %v343
        %828 = vmatprep.subr.mxu0 0.0
        %829 = vmatpush1.xpose.msra.mxu0 %v347
        %830 = vmatprep.subr.mxu0 0.0
        %831 = vmatpush1.xpose.msra.mxu0 %v351
        %832 = vmatprep.subr.mxu0 0.0
        %833 = vmatpush1.xpose.msra.mxu0 %v355
        %834 = vmatprep.subr.mxu0 0.0
        %835 = vmatpush1.xpose.msra.mxu0 %v359
        %836 = vmatprep.subr.mxu0 0.0
        %837 = vmatpush1.xpose.msra.mxu0 %v363
        %838 = vmatprep.subr.mxu0 0.0
        %839 = vmatpush1.xpose.msra.mxu0 %v367
        %840 = vmatprep.subr.mxu0 0.0
        %841 = vmatpush1.xpose.msra.mxu0 %v371
        %842 = vmatprep.subr.mxu0 0.0
        %843 = vmatpush1.xpose.msra.mxu0 %v375
        %844 = vmatprep.subr.mxu0 0.0
        %845 = vmatpush1.xpose.msra.mxu0 %v379
        %846 = vmatprep.subr.mxu0 0.0
        %847 = vmatpush1.xpose.msra.mxu0 %v383
        %848 = vmatprep.subr.mxu0 0.0
        %849 = vmatpush1.xpose.msra.mxu0 %v387
        %850 = vmatprep.subr.mxu0 0.0
        %851 = vmatpush1.xpose.msra.mxu0 %v391
        %852 = vmatprep.subr.mxu0 0.0
        %853 = vmatpush1.xpose.msra.mxu0 0.0
        %854 = vmatprep.subr.mxu0 0.0
        %855 = vmatpush1.xpose.msra.mxu0 0.0
        %856 = vmatprep.subr.mxu0 0.0
        %857 = vmatpush1.xpose.msra.mxu0 0.0
        %858 = vmatprep.subr.mxu0 0.0
        %859 = vmatpush1.xpose.msra.mxu0 0.0
        %860 = vmatprep.subr.mxu0 0.0
        %861 = vmatpush1.xpose.msra.mxu0 0.0
        %862 = vmatprep.subr.mxu0 0.0
        %863 = vmatpush1.xpose.msra.mxu0 0.0
        %864 = vmatprep.subr.mxu0 0.0
        %865 = vmatpush1.xpose.msra.mxu0 0.0
        %866 = vmatprep.subr.mxu0 0.0
        %867 = vmatpush1.xpose.msra.mxu0 0.0
        %868 = vmatprep.subr.mxu0 0.0
        %869 = vmatpush1.xpose.msra.mxu0 0.0
        %870 = vmatprep.subr.mxu0 0.0
        %871 = vmatpush1.xpose.msra.mxu0 0.0
        %872 = vmatprep.subr.mxu0 0.0
        %873 = vmatpush1.xpose.msra.mxu0 0.0
        %874 = vmatprep.subr.mxu0 0.0
        %875 = vmatpush1.xpose.msra.mxu0 0.0
        %876 = vmatprep.subr.mxu0 0.0
        %877 = vmatpush1.xpose.msra.mxu0 0.0
        %878 = vmatprep.subr.mxu0 0.0
        %879 = vmatpush1.xpose.msra.mxu0 0.0
        %880 = vmatprep.subr.mxu0 0.0
        %881 = vmatpush1.xpose.msra.mxu0 0.0
        %882 = vmatprep.subr.mxu0 0.0
        %883 = vmatpush1.xpose.msra.mxu0 0.0
        %884 = vmatprep.mubr.f32.mxu0 0.0
        %885 = vmatmul.mubr.f32.gmra.mrb[0].mxu0 %v816
        %v886 = vpop.f32.mrb[0].mxu0
        %v887 = vadd.f32 0.0, %v886
        %v888 = vpop.f32.mrb[0].mxu0
        %889 = vmatprep.mubr.f32.mxu0 0.0
        %890 = vmatmul.mubr.f32.gmra.mrb[0].mxu0 %v817
        %v891 = vpop.f32.mrb[0].mxu0
        %v892 = vadd.f32 0.0, %v891
        %v893 = vpop.f32.mrb[0].mxu0
        %894 = vmatprep.mubr.f32.mxu0 0.0
        %895 = vmatmul.mubr.f32.gmra.mrb[0].mxu0 %v818
        %v896 = vpop.f32.mrb[0].mxu0
        %v897 = vadd.f32 0.0, %v896
        %v898 = vpop.f32.mrb[0].mxu0
        %899 = vmatprep.mubr.f32.mxu0 0.0
        %900 = vmatmul.mubr.f32.gmra.mrb[0].mxu0 %v819
        %v901 = vpop.f32.mrb[0].mxu0
        %v902 = vadd.f32 0.0, %v901
        %v903 = vpop.f32.mrb[0].mxu0
        %904 = vdwg.mxu0
        %905 = vmatprep.subr.mxu0 0.0
        %906 = vmatpush1.xpose.msra.mxu0 %v330
        %907 = vmatprep.subr.mxu0 0.0
        %908 = vmatpush1.xpose.msra.mxu0 %v334
        %909 = vmatprep.subr.mxu0 0.0
        %910 = vmatpush1.xpose.msra.mxu0 %v338
        %911 = vmatprep.subr.mxu0 0.0
        %912 = vmatpush1.xpose.msra.mxu0 %v342
        %913 = vmatprep.subr.mxu0 0.0
        %914 = vmatpush1.xpose.msra.mxu0 %v346
        %915 = vmatprep.subr.mxu0 0.0
        %916 = vmatpush1.xpose.msra.mxu0 %v350
        %917 = vmatprep.subr.mxu0 0.0
        %918 = vmatpush1.xpose.msra.mxu0 %v354
        %919 = vmatprep.subr.mxu0 0.0
        %920 = vmatpush1.xpose.msra.mxu0 %v358
        %921 = vmatprep.subr.mxu0 0.0
        %922 = vmatpush1.xpose.msra.mxu0 %v362
        %923 = vmatprep.subr.mxu0 0.0
        %924 = vmatpush1.xpose.msra.mxu0 %v366
        %925 = vmatprep.subr.mxu0 0.0
        %926 = vmatpush1.xpose.msra.mxu0 %v370
        %927 = vmatprep.subr.mxu0 0.0
        %928 = vmatpush1.xpose.msra.mxu0 %v374
        %929 = vmatprep.subr.mxu0 0.0
        %930 = vmatpush1.xpose.msra.mxu0 %v378
        %931 = vmatprep.subr.mxu0 0.0
        %932 = vmatpush1.xpose.msra.mxu0 %v382
        %933 = vmatprep.subr.mxu0 0.0
        %934 = vmatpush1.xpose.msra.mxu0 %v386
        %935 = vmatprep.subr.mxu0 0.0
        %936 = vmatpush1.xpose.msra.mxu0 %v390
        %937 = vmatprep.subr.mxu0 0.0
        %938 = vmatpush1.xpose.msra.mxu0 0.0
        %939 = vmatprep.subr.mxu0 0.0
        %940 = vmatpush1.xpose.msra.mxu0 0.0
        %941 = vmatprep.subr.mxu0 0.0
        %942 = vmatpush1.xpose.msra.mxu0 0.0
        %943 = vmatprep.subr.mxu0 0.0
        %944 = vmatpush1.xpose.msra.mxu0 0.0
        %945 = vmatprep.subr.mxu0 0.0
        %946 = vmatpush1.xpose.msra.mxu0 0.0
        %947 = vmatprep.subr.mxu0 0.0
        %948 = vmatpush1.xpose.msra.mxu0 0.0
        %949 = vmatprep.subr.mxu0 0.0
        %950 = vmatpush1.xpose.msra.mxu0 0.0
        %951 = vmatprep.subr.mxu0 0.0
        %952 = vmatpush1.xpose.msra.mxu0 0.0
        %953 = vmatprep.subr.mxu0 0.0
        %954 = vmatpush1.xpose.msra.mxu0 0.0
        %955 = vmatprep.subr.mxu0 0.0
        %956 = vmatpush1.xpose.msra.mxu0 0.0
        %957 = vmatprep.subr.mxu0 0.0
        %958 = vmatpush1.xpose.msra.mxu0 0.0
        %959 = vmatprep.subr.mxu0 0.0
        %960 = vmatpush1.xpose.msra.mxu0 0.0
        %961 = vmatprep.subr.mxu0 0.0
        %962 = vmatpush1.xpose.msra.mxu0 0.0
        %963 = vmatprep.subr.mxu0 0.0
        %964 = vmatpush1.xpose.msra.mxu0 0.0
        %965 = vmatprep.subr.mxu0 0.0
        %966 = vmatpush1.xpose.msra.mxu0 0.0
        %967 = vmatprep.subr.mxu0 0.0
        %968 = vmatpush1.xpose.msra.mxu0 0.0
        %969 = vmatprep.mubr.f32.mxu0 0.0
        %970 = vmatmul.mubr.f32.gmra.mrb[0].mxu0 %v724
        %v971 = vpop.f32.mrb[0].mxu0
        %v972 = vadd.f32 %v887, %v971
        %v973 = vpop.f32.mrb[0].mxu0
        %974 = vmatprep.mubr.f32.mxu0 0.0
        %975 = vmatmul.mubr.f32.gmra.mrb[0].mxu0 %v725
        %v976 = vpop.f32.mrb[0].mxu0
        %v977 = vadd.f32 %v892, %v976
        %v978 = vpop.f32.mrb[0].mxu0
        %979 = vmatprep.mubr.f32.mxu0 0.0
        %980 = vmatmul.mubr.f32.gmra.mrb[0].mxu0 %v726
        %v981 = vpop.f32.mrb[0].mxu0
        %v982 = vadd.f32 %v897, %v981
        %v983 = vpop.f32.mrb[0].mxu0
        %984 = vmatprep.mubr.f32.mxu0 0.0
        %985 = vmatmul.mubr.f32.gmra.mrb[0].mxu0 %v727
        %v986 = vpop.f32.mrb[0].mxu0
        %v987 = vadd.f32 %v902, %v986
        %v988 = vpop.f32.mrb[0].mxu0
        %989 = vdwg.mxu0
        %vm990 = vcmp.eq.s32.totalorder %v397, 1
        %v991 = vsel %vm990, 1, 0
        %vm992 = vcmp.eq.s32.totalorder %v991, 1
        %v993 = vsel %vm992, %v639, 0.0
        %994 = vmatprep.subr.mxu0 0.0
        %995 = vmatpush1.xpose.msra.mxu0 %v816
        %996 = vmatprep.subr.mxu0 0.0
        %997 = vmatpush1.xpose.msra.mxu0 %v817
        %998 = vmatprep.subr.mxu0 0.0
        %999 = vmatpush1.xpose.msra.mxu0 %v818
        %1000 = vmatprep.subr.mxu0 0.0
        %1001 = vmatpush1.xpose.msra.mxu0 %v819
        %1002 = vmatprep.subr.mxu0 0.0
        %1003 = vmatpush1.xpose.msra.mxu0 0.0
        %1004 = vmatprep.subr.mxu0 0.0
        %1005 = vmatpush1.xpose.msra.mxu0 0.0
        %1006 = vmatprep.subr.mxu0 0.0
        %1007 = vmatpush1.xpose.msra.mxu0 0.0
        %1008 = vmatprep.subr.mxu0 0.0
        %1009 = vmatpush1.xpose.msra.mxu0 0.0
        %1010 = vmatprep.subr.mxu0 0.0
        %1011 = vmatpush1.xpose.msra.mxu0 0.0
        %1012 = vmatprep.subr.mxu0 0.0
        %1013 = vmatpush1.xpose.msra.mxu0 0.0
        %1014 = vmatprep.subr.mxu0 0.0
        %1015 = vmatpush1.xpose.msra.mxu0 0.0
        %1016 = vmatprep.subr.mxu0 0.0
        %1017 = vmatpush1.xpose.msra.mxu0 0.0
        %1018 = vmatprep.subr.mxu0 0.0
        %1019 = vmatpush1.xpose.msra.mxu0 0.0
        %1020 = vmatprep.subr.mxu0 0.0
        %1021 = vmatpush1.xpose.msra.mxu0 0.0
        %1022 = vmatprep.subr.mxu0 0.0
        %1023 = vmatpush1.xpose.msra.mxu0 0.0
        %1024 = vmatprep.subr.mxu0 0.0
        %1025 = vmatpush1.xpose.msra.mxu0 0.0
        %1026 = vmatprep.subr.mxu0 0.0
        %1027 = vmatpush1.xpose.msra.mxu0 0.0
        %1028 = vmatprep.subr.mxu0 0.0
        %1029 = vmatpush1.xpose.msra.mxu0 0.0
        %1030 = vmatprep.subr.mxu0 0.0
        %1031 = vmatpush1.xpose.msra.mxu0 0.0
        %1032 = vmatprep.subr.mxu0 0.0
        %1033 = vmatpush1.xpose.msra.mxu0 0.0
        %1034 = vmatprep.subr.mxu0 0.0
        %1035 = vmatpush1.xpose.msra.mxu0 0.0
        %1036 = vmatprep.subr.mxu0 0.0
        %1037 = vmatpush1.xpose.msra.mxu0 0.0
        %1038 = vmatprep.subr.mxu0 0.0
        %1039 = vmatpush1.xpose.msra.mxu0 0.0
        %1040 = vmatprep.subr.mxu0 0.0
        %1041 = vmatpush1.xpose.msra.mxu0 0.0
        %1042 = vmatprep.subr.mxu0 0.0
        %1043 = vmatpush1.xpose.msra.mxu0 0.0
        %1044 = vmatprep.subr.mxu0 0.0
        %1045 = vmatpush1.xpose.msra.mxu0 0.0
        %1046 = vmatprep.subr.mxu0 0.0
        %1047 = vmatpush1.xpose.msra.mxu0 0.0
        %1048 = vmatprep.subr.mxu0 0.0
        %1049 = vmatpush1.xpose.msra.mxu0 0.0
        %1050 = vmatprep.subr.mxu0 0.0
        %1051 = vmatpush1.xpose.msra.mxu0 0.0
        %1052 = vmatprep.subr.mxu0 0.0
        %1053 = vmatpush1.xpose.msra.mxu0 0.0
        %1054 = vmatprep.subr.mxu0 0.0
        %1055 = vmatpush1.xpose.msra.mxu0 0.0
        %1056 = vmatprep.subr.mxu0 0.0
        %1057 = vmatpush1.xpose.msra.mxu0 0.0
        %1058 = vmatprep.mubr.f32.mxu0 0.0
        %1059 = vmatmul.mubr.f32.gmra.mrb[0].mxu0 %v993
        %v1060 = vpop.f32.mrb[0].mxu0
        %v1061 = vadd.f32 0.0, %v1060
        %v1062 = vpop.f32.mrb[0].mxu0
        %1063 = vdwg.mxu0
        %1064 = vmatprep.subr.mxu0 0.0
        %1065 = vmatpush1.xpose.msra.mxu0 %v724
        %1066 = vmatprep.subr.mxu0 0.0
        %1067 = vmatpush1.xpose.msra.mxu0 %v725
        %1068 = vmatprep.subr.mxu0 0.0
        %1069 = vmatpush1.xpose.msra.mxu0 %v726
        %1070 = vmatprep.subr.mxu0 0.0
        %1071 = vmatpush1.xpose.msra.mxu0 %v727
        %1072 = vmatprep.subr.mxu0 0.0
        %1073 = vmatpush1.xpose.msra.mxu0 0.0
        %1074 = vmatprep.subr.mxu0 0.0
        %1075 = vmatpush1.xpose.msra.mxu0 0.0
        %1076 = vmatprep.subr.mxu0 0.0
        %1077 = vmatpush1.xpose.msra.mxu0 0.0
        %1078 = vmatprep.subr.mxu0 0.0
        %1079 = vmatpush1.xpose.msra.mxu0 0.0
        %1080 = vmatprep.subr.mxu0 0.0
        %1081 = vmatpush1.xpose.msra.mxu0 0.0
        %1082 = vmatprep.subr.mxu0 0.0
        %1083 = vmatpush1.xpose.msra.mxu0 0.0
        %1084 = vmatprep.subr.mxu0 0.0
        %1085 = vmatpush1.xpose.msra.mxu0 0.0
        %1086 = vmatprep.subr.mxu0 0.0
        %1087 = vmatpush1.xpose.msra.mxu0 0.0
        %1088 = vmatprep.subr.mxu0 0.0
        %1089 = vmatpush1.xpose.msra.mxu0 0.0
        %1090 = vmatprep.subr.mxu0 0.0
        %1091 = vmatpush1.xpose.msra.mxu0 0.0
        %1092 = vmatprep.subr.mxu0 0.0
        %1093 = vmatpush1.xpose.msra.mxu0 0.0
        %1094 = vmatprep.subr.mxu0 0.0
        %1095 = vmatpush1.xpose.msra.mxu0 0.0
        %1096 = vmatprep.subr.mxu0 0.0
        %1097 = vmatpush1.xpose.msra.mxu0 0.0
        %1098 = vmatprep.subr.mxu0 0.0
        %1099 = vmatpush1.xpose.msra.mxu0 0.0
        %1100 = vmatprep.subr.mxu0 0.0
        %1101 = vmatpush1.xpose.msra.mxu0 0.0
        %1102 = vmatprep.subr.mxu0 0.0
        %1103 = vmatpush1.xpose.msra.mxu0 0.0
        %1104 = vmatprep.subr.mxu0 0.0
        %1105 = vmatpush1.xpose.msra.mxu0 0.0
        %1106 = vmatprep.subr.mxu0 0.0
        %1107 = vmatpush1.xpose.msra.mxu0 0.0
        %1108 = vmatprep.subr.mxu0 0.0
        %1109 = vmatpush1.xpose.msra.mxu0 0.0
        %1110 = vmatprep.subr.mxu0 0.0
        %1111 = vmatpush1.xpose.msra.mxu0 0.0
        %1112 = vmatprep.subr.mxu0 0.0
        %1113 = vmatpush1.xpose.msra.mxu0 0.0
        %1114 = vmatprep.subr.mxu0 0.0
        %1115 = vmatpush1.xpose.msra.mxu0 0.0
        %1116 = vmatprep.subr.mxu0 0.0
        %1117 = vmatpush1.xpose.msra.mxu0 0.0
        %1118 = vmatprep.subr.mxu0 0.0
        %1119 = vmatpush1.xpose.msra.mxu0 0.0
        %1120 = vmatprep.subr.mxu0 0.0
        %1121 = vmatpush1.xpose.msra.mxu0 0.0
        %1122 = vmatprep.subr.mxu0 0.0
        %1123 = vmatpush1.xpose.msra.mxu0 0.0
        %1124 = vmatprep.subr.mxu0 0.0
        %1125 = vmatpush1.xpose.msra.mxu0 0.0
        %1126 = vmatprep.subr.mxu0 0.0
        %1127 = vmatpush1.xpose.msra.mxu0 0.0
        %1128 = vmatprep.mubr.f32.mxu0 0.0
        %1129 = vmatmul.mubr.f32.gmra.mrb[0].mxu0 %v731
        %v1130 = vpop.f32.mrb[0].mxu0
        %v1131 = vadd.f32 %v1061, %v1130
        %v1132 = vpop.f32.mrb[0].mxu0
        %1133 = vdwg.mxu0
        %vm1134 = vcmask 261120
        %v1136 = vsel %vm1134, %v643, 0
        %1138 = vmatprep.subr.mxu0 0.0
        %1139 = vmatpush1.msra.mxu0 %v816
        %1140 = vmatprep.subr.mxu0 0.0
        %1141 = vmatpush1.msra.mxu0 %v817
        %1142 = vmatprep.subr.mxu0 0.0
        %1143 = vmatpush1.msra.mxu0 %v818
        %1144 = vmatprep.subr.mxu0 0.0
        %1145 = vmatpush1.msra.mxu0 %v819
        %1146 = vmatprep.subr.mxu0 0.0
        %1147 = vmatpush1.msra.mxu0 0.0
        %1148 = vmatprep.subr.mxu0 0.0
        %1149 = vmatpush1.msra.mxu0 0.0
        %1150 = vmatprep.subr.mxu0 0.0
        %1151 = vmatpush1.msra.mxu0 0.0
        %1152 = vmatprep.subr.mxu0 0.0
        %1153 = vmatpush1.msra.mxu0 0.0
        %1154 = vmatprep.subr.mxu0 0.0
        %1155 = vmatpush1.msra.mxu0 0.0
        %1156 = vmatprep.subr.mxu0 0.0
        %1157 = vmatpush1.msra.mxu0 0.0
        %1158 = vmatprep.subr.mxu0 0.0
        %1159 = vmatpush1.msra.mxu0 0.0
        %1160 = vmatprep.subr.mxu0 0.0
        %1161 = vmatpush1.msra.mxu0 0.0
        %1162 = vmatprep.subr.mxu0 0.0
        %1163 = vmatpush1.msra.mxu0 0.0
        %1164 = vmatprep.subr.mxu0 0.0
        %1165 = vmatpush1.msra.mxu0 0.0
        %1166 = vmatprep.subr.mxu0 0.0
        %1167 = vmatpush1.msra.mxu0 0.0
        %1168 = vmatprep.subr.mxu0 0.0
        %1169 = vmatpush1.msra.mxu0 0.0
        %1170 = vmatprep.subr.mxu0 0.0
        %1171 = vmatpush1.msra.mxu0 0.0
        %1172 = vmatprep.subr.mxu0 0.0
        %1173 = vmatpush1.msra.mxu0 0.0
        %1174 = vmatprep.subr.mxu0 0.0
        %1175 = vmatpush1.msra.mxu0 0.0
        %1176 = vmatprep.subr.mxu0 0.0
        %1177 = vmatpush1.msra.mxu0 0.0
        %1178 = vmatprep.subr.mxu0 0.0
        %1179 = vmatpush1.msra.mxu0 0.0
        %1180 = vmatprep.subr.mxu0 0.0
        %1181 = vmatpush1.msra.mxu0 0.0
        %1182 = vmatprep.subr.mxu0 0.0
        %1183 = vmatpush1.msra.mxu0 0.0
        %1184 = vmatprep.subr.mxu0 0.0
        %1185 = vmatpush1.msra.mxu0 0.0
        %1186 = vmatprep.subr.mxu0 0.0
        %1187 = vmatpush1.msra.mxu0 0.0
        %1188 = vmatprep.subr.mxu0 0.0
        %1189 = vmatpush1.msra.mxu0 0.0
        %1190 = vmatprep.subr.mxu0 0.0
        %1191 = vmatpush1.msra.mxu0 0.0
        %1192 = vmatprep.subr.mxu0 0.0
        %1193 = vmatpush1.msra.mxu0 0.0
        %1194 = vmatprep.subr.mxu0 0.0
        %1195 = vmatpush1.msra.mxu0 0.0
        %1196 = vmatprep.subr.mxu0 0.0
        %1197 = vmatpush1.msra.mxu0 0.0
        %1198 = vmatprep.subr.mxu0 0.0
        %1199 = vmatpush1.msra.mxu0 0.0
        %1200 = vmatprep.subr.mxu0 0.0
        %1201 = vmatpush1.msra.mxu0 0.0
        %1202 = vmatprep.mubr.f32.mxu0 0.0
        %1203 = vmatmul.mubr.f32.gmra.mrb[0].mxu0 %v1136
        %v1204 = vpop.f32.mrb[0].mxu0
        %v1205 = vadd.f32 0.0, %v1204
        %v1206 = vpop.f32.mrb[0].mxu0
        %1207 = vdwg.mxu0
        %1208 = vmatprep.subr.mxu0 0.0
        %1209 = vmatpush1.msra.mxu0 %v724
        %1210 = vmatprep.subr.mxu0 0.0
        %1211 = vmatpush1.msra.mxu0 %v725
        %1212 = vmatprep.subr.mxu0 0.0
        %1213 = vmatpush1.msra.mxu0 %v726
        %1214 = vmatprep.subr.mxu0 0.0
        %1215 = vmatpush1.msra.mxu0 %v727
        %1216 = vmatprep.subr.mxu0 0.0
        %1217 = vmatpush1.msra.mxu0 0.0
        %1218 = vmatprep.subr.mxu0 0.0
        %1219 = vmatpush1.msra.mxu0 0.0
        %1220 = vmatprep.subr.mxu0 0.0
        %1221 = vmatpush1.msra.mxu0 0.0
        %1222 = vmatprep.subr.mxu0 0.0
        %1223 = vmatpush1.msra.mxu0 0.0
        %1224 = vmatprep.subr.mxu0 0.0
        %1225 = vmatpush1.msra.mxu0 0.0
        %1226 = vmatprep.subr.mxu0 0.0
        %1227 = vmatpush1.msra.mxu0 0.0
        %1228 = vmatprep.subr.mxu0 0.0
        %1229 = vmatpush1.msra.mxu0 0.0
        %1230 = vmatprep.subr.mxu0 0.0
        %1231 = vmatpush1.msra.mxu0 0.0
        %1232 = vmatprep.subr.mxu0 0.0
        %1233 = vmatpush1.msra.mxu0 0.0
        %1234 = vmatprep.subr.mxu0 0.0
        %1235 = vmatpush1.msra.mxu0 0.0
        %1236 = vmatprep.subr.mxu0 0.0
        %1237 = vmatpush1.msra.mxu0 0.0
        %1238 = vmatprep.subr.mxu0 0.0
        %1239 = vmatpush1.msra.mxu0 0.0
        %1240 = vmatprep.subr.mxu0 0.0
        %1241 = vmatpush1.msra.mxu0 0.0
        %1242 = vmatprep.subr.mxu0 0.0
        %1243 = vmatpush1.msra.mxu0 0.0
        %1244 = vmatprep.subr.mxu0 0.0
        %1245 = vmatpush1.msra.mxu0 0.0
        %1246 = vmatprep.subr.mxu0 0.0
        %1247 = vmatpush1.msra.mxu0 0.0
        %1248 = vmatprep.subr.mxu0 0.0
        %1249 = vmatpush1.msra.mxu0 0.0
        %1250 = vmatprep.subr.mxu0 0.0
        %1251 = vmatpush1.msra.mxu0 0.0
        %1252 = vmatprep.subr.mxu0 0.0
        %1253 = vmatpush1.msra.mxu0 0.0
        %1254 = vmatprep.subr.mxu0 0.0
        %1255 = vmatpush1.msra.mxu0 0.0
        %1256 = vmatprep.subr.mxu0 0.0
        %1257 = vmatpush1.msra.mxu0 0.0
        %1258 = vmatprep.subr.mxu0 0.0
        %1259 = vmatpush1.msra.mxu0 0.0
        %1260 = vmatprep.subr.mxu0 0.0
        %1261 = vmatpush1.msra.mxu0 0.0
        %1262 = vmatprep.subr.mxu0 0.0
        %1263 = vmatpush1.msra.mxu0 0.0
        %1264 = vmatprep.subr.mxu0 0.0
        %1265 = vmatpush1.msra.mxu0 0.0
        %1266 = vmatprep.subr.mxu0 0.0
        %1267 = vmatpush1.msra.mxu0 0.0
        %1268 = vmatprep.subr.mxu0 0.0
        %1269 = vmatpush1.msra.mxu0 0.0
        %1270 = vmatprep.subr.mxu0 0.0
        %1271 = vmatpush1.msra.mxu0 0.0
        %1272 = vmatprep.mubr.f32.mxu0 0.0
        %1273 = vmatmul.mubr.f32.gmra.mrb[0].mxu0 %v1136
        %v1274 = vpop.f32.mrb[0].mxu0
        %v1275 = vadd.f32 %v1205, %v1274
        %v1276 = vpop.f32.mrb[0].mxu0
        %1277 = vdwg.mxu0
        %v1278 = vadd.f32 %v732, %v737
        %v1279 = vadd.f32 %v733, %v739
        %v1280 = vadd.f32 %v734, %v741
        %v1281 = vadd.f32 %v735, %v743
        %1282 = vmin.xlane.f32.xlu0 %v623
        %v1283 = vpop.xlane.xlu0 %1282
        %1284 = vmin.xlane.f32.xlu0 %v627
        %v1285 = vpop.xlane.xlu0 %1284
        %1286 = vmin.xlane.f32.xlu0 %v631
        %v1287 = vpop.xlane.xlu0 %1286
        %1288 = vmin.xlane.f32.xlu0 %v635
        %v1289 = vpop.xlane.xlu0 %1288
        %vm1290 = vcmp.eq.f32.partialorder %v623, %v1283
        %vm1291 = vcmp.eq.f32.partialorder %v627, %v1285
        %vm1292 = vcmp.eq.f32.partialorder %v631, %v1287
        %vm1293 = vcmp.eq.f32.partialorder %v635, %v1289
        %v1294 = vsel %vm1290, %v638, 128
        %v1295 = vsel %vm1291, %v638, 128
        %v1296 = vsel %vm1292, %v638, 128
        %v1297 = vsel %vm1293, %v638, 128
        %v1298 = vand.u32 %v1294, 65535
        %v1299 = vshra.s32 %v1294, 16
        %v1300 = vcvt.s32.f32 %v1298
        %v1301 = vcvt.s32.f32 %v1299
        %1302 = vmin.xlane.f32.xlu0 %v1301
        %v1303 = vpop.xlane.xlu0 %1302
        %vm1304 = vcmp.eq.f32.partialorder %v1301, %v1303
        %v1305 = vsel %vm1304, %v1300, inf
        %1306 = vmin.xlane.f32.xlu0 %v1305
        %v1307 = vpop.xlane.xlu0 %1306
        %v1308 = vcvt.f32.s32 %v1307
        %v1309 = vcvt.f32.s32 %v1303
        %v1310 = vshll.u32 %v1309, 16
        %v1311 = vadd.s32 %v1310, %v1308
        %v1312 = vand.u32 %v1295, 65535
        %v1313 = vshra.s32 %v1295, 16
        %v1314 = vcvt.s32.f32 %v1312
        %v1315 = vcvt.s32.f32 %v1313
        %1316 = vmin.xlane.f32.xlu0 %v1315
        %v1317 = vpop.xlane.xlu0 %1316
        %vm1318 = vcmp.eq.f32.partialorder %v1315, %v1317
        %v1319 = vsel %vm1318, %v1314, inf
        %1320 = vmin.xlane.f32.xlu0 %v1319
        %v1321 = vpop.xlane.xlu0 %1320
        %v1322 = vcvt.f32.s32 %v1321
        %v1323 = vcvt.f32.s32 %v1317
        %v1324 = vshll.u32 %v1323, 16
        %v1325 = vadd.s32 %v1324, %v1322
        %v1326 = vand.u32 %v1296, 65535
        %v1327 = vshra.s32 %v1296, 16
        %v1328 = vcvt.s32.f32 %v1326
        %v1329 = vcvt.s32.f32 %v1327
        %1330 = vmin.xlane.f32.xlu0 %v1329
        %v1331 = vpop.xlane.xlu0 %1330
        %vm1332 = vcmp.eq.f32.partialorder %v1329, %v1331
        %v1333 = vsel %vm1332, %v1328, inf
        %1334 = vmin.xlane.f32.xlu0 %v1333
        %v1335 = vpop.xlane.xlu0 %1334
        %v1336 = vcvt.f32.s32 %v1335
        %v1337 = vcvt.f32.s32 %v1331
        %v1338 = vshll.u32 %v1337, 16
        %v1339 = vadd.s32 %v1338, %v1336
        %v1340 = vand.u32 %v1297, 65535
        %v1341 = vshra.s32 %v1297, 16
        %v1342 = vcvt.s32.f32 %v1340
        %v1343 = vcvt.s32.f32 %v1341
        %1344 = vmin.xlane.f32.xlu0 %v1343
        %v1345 = vpop.xlane.xlu0 %1344
        %vm1346 = vcmp.eq.f32.partialorder %v1343, %v1345
        %v1347 = vsel %vm1346, %v1342, inf
        %1348 = vmin.xlane.f32.xlu0 %v1347
        %v1349 = vpop.xlane.xlu0 %1348
        %v1350 = vcvt.f32.s32 %v1349
        %v1351 = vcvt.f32.s32 %v1345
        %v1352 = vshll.u32 %v1351, 16
        %v1353 = vadd.s32 %v1352, %v1350
        %vm1354 = vcmp.eq.s32.totalorder %v638, %v1311
        %vm1355 = vcmp.eq.s32.totalorder %v638, %v1325
        %vm1356 = vcmp.eq.s32.totalorder %v638, %v1339
        %vm1357 = vcmp.eq.s32.totalorder %v638, %v1353
        %v1358 = vsel %vm1354, 1, 0
        %v1359 = vsel %vm1355, 1, 0
        %v1360 = vsel %vm1356, 1, 0
        %v1361 = vsel %vm1357, 1, 0
        %v1362 = vcvt.s32.f32 %v1358
        %v1363 = vcvt.s32.f32 %v1359
        %v1364 = vcvt.s32.f32 %v1360
        %v1365 = vcvt.s32.f32 %v1361
        %1366 = vmatprep.subr.mxu0 0.0
        %1367 = vmatpush1.xpose.msra.mxu0 %v332
        %1368 = vmatprep.subr.mxu0 0.0
        %1369 = vmatpush1.xpose.msra.mxu0 %v336
        %1370 = vmatprep.subr.mxu0 0.0
        %1371 = vmatpush1.xpose.msra.mxu0 %v340
        %1372 = vmatprep.subr.mxu0 0.0
        %1373 = vmatpush1.xpose.msra.mxu0 %v344
        %1374 = vmatprep.subr.mxu0 0.0
        %1375 = vmatpush1.xpose.msra.mxu0 %v348
        %1376 = vmatprep.subr.mxu0 0.0
        %1377 = vmatpush1.xpose.msra.mxu0 %v352
        %1378 = vmatprep.subr.mxu0 0.0
        %1379 = vmatpush1.xpose.msra.mxu0 %v356
        %1380 = vmatprep.subr.mxu0 0.0
        %1381 = vmatpush1.xpose.msra.mxu0 %v360
        %1382 = vmatprep.subr.mxu0 0.0
        %1383 = vmatpush1.xpose.msra.mxu0 %v364
        %1384 = vmatprep.subr.mxu0 0.0
        %1385 = vmatpush1.xpose.msra.mxu0 %v368
        %1386 = vmatprep.subr.mxu0 0.0
        %1387 = vmatpush1.xpose.msra.mxu0 %v372
        %1388 = vmatprep.subr.mxu0 0.0
        %1389 = vmatpush1.xpose.msra.mxu0 %v376
        %1390 = vmatprep.subr.mxu0 0.0
        %1391 = vmatpush1.xpose.msra.mxu0 %v380
        %1392 = vmatprep.subr.mxu0 0.0
        %1393 = vmatpush1.xpose.msra.mxu0 %v384
        %1394 = vmatprep.subr.mxu0 0.0
        %1395 = vmatpush1.xpose.msra.mxu0 %v388
        %1396 = vmatprep.subr.mxu0 0.0
        %1397 = vmatpush1.xpose.msra.mxu0 %v392
        %1398 = vmatprep.subr.mxu0 0.0
        %1399 = vmatpush1.xpose.msra.mxu0 0.0
        %1400 = vmatprep.subr.mxu0 0.0
        %1401 = vmatpush1.xpose.msra.mxu0 0.0
        %1402 = vmatprep.subr.mxu0 0.0
        %1403 = vmatpush1.xpose.msra.mxu0 0.0
        %1404 = vmatprep.subr.mxu0 0.0
        %1405 = vmatpush1.xpose.msra.mxu0 0.0
        %1406 = vmatprep.subr.mxu0 0.0
        %1407 = vmatpush1.xpose.msra.mxu0 0.0
        %1408 = vmatprep.subr.mxu0 0.0
        %1409 = vmatpush1.xpose.msra.mxu0 0.0
        %1410 = vmatprep.subr.mxu0 0.0
        %1411 = vmatpush1.xpose.msra.mxu0 0.0
        %1412 = vmatprep.subr.mxu0 0.0
        %1413 = vmatpush1.xpose.msra.mxu0 0.0
        %1414 = vmatprep.subr.mxu0 0.0
        %1415 = vmatpush1.xpose.msra.mxu0 0.0
        %1416 = vmatprep.subr.mxu0 0.0
        %1417 = vmatpush1.xpose.msra.mxu0 0.0
        %1418 = vmatprep.subr.mxu0 0.0
        %1419 = vmatpush1.xpose.msra.mxu0 0.0
        %1420 = vmatprep.subr.mxu0 0.0
        %1421 = vmatpush1.xpose.msra.mxu0 0.0
        %1422 = vmatprep.subr.mxu0 0.0
        %1423 = vmatpush1.xpose.msra.mxu0 0.0
        %1424 = vmatprep.subr.mxu0 0.0
        %1425 = vmatpush1.xpose.msra.mxu0 0.0
        %1426 = vmatprep.subr.mxu0 0.0
        %1427 = vmatpush1.xpose.msra.mxu0 0.0
        %1428 = vmatprep.subr.mxu0 0.0
        %1429 = vmatpush1.xpose.msra.mxu0 0.0
        %1430 = vmatprep.mubr.f32.mxu0 0.0
        %1431 = vmatmul.mubr.f32.gmra.mrb[0].mxu0 %v1362
        %v1432 = vpop.f32.mrb[0].mxu0
        %v1433 = vadd.f32 0.0, %v1432
        %v1434 = vpop.f32.mrb[0].mxu0
        %1435 = vmatprep.mubr.f32.mxu0 0.0
        %1436 = vmatmul.mubr.f32.gmra.mrb[0].mxu0 %v1363
        %v1437 = vpop.f32.mrb[0].mxu0
        %v1438 = vadd.f32 0.0, %v1437
        %v1439 = vpop.f32.mrb[0].mxu0
        %1440 = vmatprep.mubr.f32.mxu0 0.0
        %1441 = vmatmul.mubr.f32.gmra.mrb[0].mxu0 %v1364
        %v1442 = vpop.f32.mrb[0].mxu0
        %v1443 = vadd.f32 0.0, %v1442
        %v1444 = vpop.f32.mrb[0].mxu0
        %1445 = vmatprep.mubr.f32.mxu0 0.0
        %1446 = vmatmul.mubr.f32.gmra.mrb[0].mxu0 %v1365
        %v1447 = vpop.f32.mrb[0].mxu0
        %v1448 = vadd.f32 0.0, %v1447
        %v1449 = vpop.f32.mrb[0].mxu0
        %1450 = vdwg.mxu0
        %v1451 = vadd.f32 %v972, %v1433
        %v1452 = vadd.f32 %v977, %v1438
        %v1453 = vadd.f32 %v982, %v1443
        %v1454 = vadd.f32 %v987, %v1448
        %vm1455 = vcmp.eq.s32.totalorder %v397, 2
        %v1456 = vsel %vm1455, 1, 0
        %vm1457 = vcmp.eq.s32.totalorder %v1456, 1
        %v1458 = vsel %vm1457, %v639, 0.0
        %1459 = vmatprep.subr.mxu0 0.0
        %1460 = vmatpush1.xpose.msra.mxu0 %v1362
        %1461 = vmatprep.subr.mxu0 0.0
        %1462 = vmatpush1.xpose.msra.mxu0 %v1363
        %1463 = vmatprep.subr.mxu0 0.0
        %1464 = vmatpush1.xpose.msra.mxu0 %v1364
        %1465 = vmatprep.subr.mxu0 0.0
        %1466 = vmatpush1.xpose.msra.mxu0 %v1365
        %1467 = vmatprep.subr.mxu0 0.0
        %1468 = vmatpush1.xpose.msra.mxu0 0.0
        %1469 = vmatprep.subr.mxu0 0.0
        %1470 = vmatpush1.xpose.msra.mxu0 0.0
        %1471 = vmatprep.subr.mxu0 0.0
        %1472 = vmatpush1.xpose.msra.mxu0 0.0
        %1473 = vmatprep.subr.mxu0 0.0
        %1474 = vmatpush1.xpose.msra.mxu0 0.0
        %1475 = vmatprep.subr.mxu0 0.0
        %1476 = vmatpush1.xpose.msra.mxu0 0.0
        %1477 = vmatprep.subr.mxu0 0.0
        %1478 = vmatpush1.xpose.msra.mxu0 0.0
        %1479 = vmatprep.subr.mxu0 0.0
        %1480 = vmatpush1.xpose.msra.mxu0 0.0
        %1481 = vmatprep.subr.mxu0 0.0
        %1482 = vmatpush1.xpose.msra.mxu0 0.0
        %1483 = vmatprep.subr.mxu0 0.0
        %1484 = vmatpush1.xpose.msra.mxu0 0.0
        %1485 = vmatprep.subr.mxu0 0.0
        %1486 = vmatpush1.xpose.msra.mxu0 0.0
        %1487 = vmatprep.subr.mxu0 0.0
        %1488 = vmatpush1.xpose.msra.mxu0 0.0
        %1489 = vmatprep.subr.mxu0 0.0
        %1490 = vmatpush1.xpose.msra.mxu0 0.0
        %1491 = vmatprep.subr.mxu0 0.0
        %1492 = vmatpush1.xpose.msra.mxu0 0.0
        %1493 = vmatprep.subr.mxu0 0.0
        %1494 = vmatpush1.xpose.msra.mxu0 0.0
        %1495 = vmatprep.subr.mxu0 0.0
        %1496 = vmatpush1.xpose.msra.mxu0 0.0
        %1497 = vmatprep.subr.mxu0 0.0
        %1498 = vmatpush1.xpose.msra.mxu0 0.0
        %1499 = vmatprep.subr.mxu0 0.0
        %1500 = vmatpush1.xpose.msra.mxu0 0.0
        %1501 = vmatprep.subr.mxu0 0.0
        %1502 = vmatpush1.xpose.msra.mxu0 0.0
        %1503 = vmatprep.subr.mxu0 0.0
        %1504 = vmatpush1.xpose.msra.mxu0 0.0
        %1505 = vmatprep.subr.mxu0 0.0
        %1506 = vmatpush1.xpose.msra.mxu0 0.0
        %1507 = vmatprep.subr.mxu0 0.0
        %1508 = vmatpush1.xpose.msra.mxu0 0.0
        %1509 = vmatprep.subr.mxu0 0.0
        %1510 = vmatpush1.xpose.msra.mxu0 0.0
        %1511 = vmatprep.subr.mxu0 0.0
        %1512 = vmatpush1.xpose.msra.mxu0 0.0
        %1513 = vmatprep.subr.mxu0 0.0
        %1514 = vmatpush1.xpose.msra.mxu0 0.0
        %1515 = vmatprep.subr.mxu0 0.0
        %1516 = vmatpush1.xpose.msra.mxu0 0.0
        %1517 = vmatprep.subr.mxu0 0.0
        %1518 = vmatpush1.xpose.msra.mxu0 0.0
        %1519 = vmatprep.subr.mxu0 0.0
        %1520 = vmatpush1.xpose.msra.mxu0 0.0
        %1521 = vmatprep.subr.mxu0 0.0
        %1522 = vmatpush1.xpose.msra.mxu0 0.0
        %1523 = vmatprep.mubr.f32.mxu0 0.0
        %1524 = vmatmul.mubr.f32.gmra.mrb[0].mxu0 %v1458
        %v1525 = vpop.f32.mrb[0].mxu0
        %v1526 = vadd.f32 0.0, %v1525
        %v1527 = vpop.f32.mrb[0].mxu0
        %1528 = vdwg.mxu0
        %v1529 = vadd.f32 %v1131, %v1526
        %1530 = vmatprep.subr.mxu0 0.0
        %1531 = vmatpush1.msra.mxu0 %v1362
        %1532 = vmatprep.subr.mxu0 0.0
        %1533 = vmatpush1.msra.mxu0 %v1363
        %1534 = vmatprep.subr.mxu0 0.0
        %1535 = vmatpush1.msra.mxu0 %v1364
        %1536 = vmatprep.subr.mxu0 0.0
        %1537 = vmatpush1.msra.mxu0 %v1365
        %1538 = vmatprep.subr.mxu0 0.0
        %1539 = vmatpush1.msra.mxu0 0.0
        %1540 = vmatprep.subr.mxu0 0.0
        %1541 = vmatpush1.msra.mxu0 0.0
        %1542 = vmatprep.subr.mxu0 0.0
        %1543 = vmatpush1.msra.mxu0 0.0
        %1544 = vmatprep.subr.mxu0 0.0
        %1545 = vmatpush1.msra.mxu0 0.0
        %1546 = vmatprep.subr.mxu0 0.0
        %1547 = vmatpush1.msra.mxu0 0.0
        %1548 = vmatprep.subr.mxu0 0.0
        %1549 = vmatpush1.msra.mxu0 0.0
        %1550 = vmatprep.subr.mxu0 0.0
        %1551 = vmatpush1.msra.mxu0 0.0
        %1552 = vmatprep.subr.mxu0 0.0
        %1553 = vmatpush1.msra.mxu0 0.0
        %1554 = vmatprep.subr.mxu0 0.0
        %1555 = vmatpush1.msra.mxu0 0.0
        %1556 = vmatprep.subr.mxu0 0.0
        %1557 = vmatpush1.msra.mxu0 0.0
        %1558 = vmatprep.subr.mxu0 0.0
        %1559 = vmatpush1.msra.mxu0 0.0
        %1560 = vmatprep.subr.mxu0 0.0
        %1561 = vmatpush1.msra.mxu0 0.0
        %1562 = vmatprep.subr.mxu0 0.0
        %1563 = vmatpush1.msra.mxu0 0.0
        %1564 = vmatprep.subr.mxu0 0.0
        %1565 = vmatpush1.msra.mxu0 0.0
        %1566 = vmatprep.subr.mxu0 0.0
        %1567 = vmatpush1.msra.mxu0 0.0
        %1568 = vmatprep.subr.mxu0 0.0
        %1569 = vmatpush1.msra.mxu0 0.0
        %1570 = vmatprep.subr.mxu0 0.0
        %1571 = vmatpush1.msra.mxu0 0.0
        %1572 = vmatprep.subr.mxu0 0.0
        %1573 = vmatpush1.msra.mxu0 0.0
        %1574 = vmatprep.subr.mxu0 0.0
        %1575 = vmatpush1.msra.mxu0 0.0
        %1576 = vmatprep.subr.mxu0 0.0
        %1577 = vmatpush1.msra.mxu0 0.0
        %1578 = vmatprep.subr.mxu0 0.0
        %1579 = vmatpush1.msra.mxu0 0.0
        %1580 = vmatprep.subr.mxu0 0.0
        %1581 = vmatpush1.msra.mxu0 0.0
        %1582 = vmatprep.subr.mxu0 0.0
        %1583 = vmatpush1.msra.mxu0 0.0
        %1584 = vmatprep.subr.mxu0 0.0
        %1585 = vmatpush1.msra.mxu0 0.0
        %1586 = vmatprep.subr.mxu0 0.0
        %1587 = vmatpush1.msra.mxu0 0.0
        %1588 = vmatprep.subr.mxu0 0.0
        %1589 = vmatpush1.msra.mxu0 0.0
        %1590 = vmatprep.subr.mxu0 0.0
        %1591 = vmatpush1.msra.mxu0 0.0
        %1592 = vmatprep.subr.mxu0 0.0
        %1593 = vmatpush1.msra.mxu0 0.0
        %1594 = vmatprep.mubr.f32.mxu0 0.0
        %1595 = vmatmul.mubr.f32.gmra.mrb[0].mxu0 %v1136
        %v1596 = vpop.f32.mrb[0].mxu0
        %v1597 = vadd.f32 0.0, %v1596
        %v1598 = vpop.f32.mrb[0].mxu0
        %1599 = vdwg.mxu0
        %v1600 = vadd.f32 %v1275, %v1597
        %v1601 = vadd.f32 %v1278, %v1283
        %v1602 = vadd.f32 %v1279, %v1285
        %v1603 = vadd.f32 %v1280, %v1287
        %v1604 = vadd.f32 %v1281, %v1289
        %1605 = vmin.xlane.f32.xlu0 %v624
        %v1606 = vpop.xlane.xlu0 %1605
        %1607 = vmin.xlane.f32.xlu0 %v628
        %v1608 = vpop.xlane.xlu0 %1607
        %1609 = vmin.xlane.f32.xlu0 %v632
        %v1610 = vpop.xlane.xlu0 %1609
        %1611 = vmin.xlane.f32.xlu0 %v636
        %v1612 = vpop.xlane.xlu0 %1611
        %vm1613 = vcmp.eq.f32.partialorder %v624, %v1606
        %vm1614 = vcmp.eq.f32.partialorder %v628, %v1608
        %vm1615 = vcmp.eq.f32.partialorder %v632, %v1610
        %vm1616 = vcmp.eq.f32.partialorder %v636, %v1612
        %v1617 = vsel %vm1613, %v638, 128
        %v1618 = vsel %vm1614, %v638, 128
        %v1619 = vsel %vm1615, %v638, 128
        %v1620 = vsel %vm1616, %v638, 128
        %v1621 = vand.u32 %v1617, 65535
        %v1622 = vshra.s32 %v1617, 16
        %v1623 = vcvt.s32.f32 %v1621
        %v1624 = vcvt.s32.f32 %v1622
        %1625 = vmin.xlane.f32.xlu0 %v1624
        %v1626 = vpop.xlane.xlu0 %1625
        %vm1627 = vcmp.eq.f32.partialorder %v1624, %v1626
        %v1628 = vsel %vm1627, %v1623, inf
        %1629 = vmin.xlane.f32.xlu0 %v1628
        %v1630 = vpop.xlane.xlu0 %1629
        %v1631 = vcvt.f32.s32 %v1630
        %v1632 = vcvt.f32.s32 %v1626
        %v1633 = vshll.u32 %v1632, 16
        %v1634 = vadd.s32 %v1633, %v1631
        %v1635 = vand.u32 %v1618, 65535
        %v1636 = vshra.s32 %v1618, 16
        %v1637 = vcvt.s32.f32 %v1635
        %v1638 = vcvt.s32.f32 %v1636
        %1639 = vmin.xlane.f32.xlu0 %v1638
        %v1640 = vpop.xlane.xlu0 %1639
        %vm1641 = vcmp.eq.f32.partialorder %v1638, %v1640
        %v1642 = vsel %vm1641, %v1637, inf
        %1643 = vmin.xlane.f32.xlu0 %v1642
        %v1644 = vpop.xlane.xlu0 %1643
        %v1645 = vcvt.f32.s32 %v1644
        %v1646 = vcvt.f32.s32 %v1640
        %v1647 = vshll.u32 %v1646, 16
        %v1648 = vadd.s32 %v1647, %v1645
        %v1649 = vand.u32 %v1619, 65535
        %v1650 = vshra.s32 %v1619, 16
        %v1651 = vcvt.s32.f32 %v1649
        %v1652 = vcvt.s32.f32 %v1650
        %1653 = vmin.xlane.f32.xlu0 %v1652
        %v1654 = vpop.xlane.xlu0 %1653
        %vm1655 = vcmp.eq.f32.partialorder %v1652, %v1654
        %v1656 = vsel %vm1655, %v1651, inf
        %1657 = vmin.xlane.f32.xlu0 %v1656
        %v1658 = vpop.xlane.xlu0 %1657
        %v1659 = vcvt.f32.s32 %v1658
        %v1660 = vcvt.f32.s32 %v1654
        %v1661 = vshll.u32 %v1660, 16
        %v1662 = vadd.s32 %v1661, %v1659
        %v1663 = vand.u32 %v1620, 65535
        %v1664 = vshra.s32 %v1620, 16
        %v1665 = vcvt.s32.f32 %v1663
        %v1666 = vcvt.s32.f32 %v1664
        %1667 = vmin.xlane.f32.xlu0 %v1666
        %v1668 = vpop.xlane.xlu0 %1667
        %vm1669 = vcmp.eq.f32.partialorder %v1666, %v1668
        %v1670 = vsel %vm1669, %v1665, inf
        %1671 = vmin.xlane.f32.xlu0 %v1670
        %v1672 = vpop.xlane.xlu0 %1671
        %v1673 = vcvt.f32.s32 %v1672
        %v1674 = vcvt.f32.s32 %v1668
        %v1675 = vshll.u32 %v1674, 16
        %v1676 = vadd.s32 %v1675, %v1673
        %vm1677 = vcmp.eq.s32.totalorder %v638, %v1634
        %vm1678 = vcmp.eq.s32.totalorder %v638, %v1648
        %vm1679 = vcmp.eq.s32.totalorder %v638, %v1662
        %vm1680 = vcmp.eq.s32.totalorder %v638, %v1676
        %v1681 = vsel %vm1677, 1, 0
        %v1682 = vsel %vm1678, 1, 0
        %v1683 = vsel %vm1679, 1, 0
        %v1684 = vsel %vm1680, 1, 0
        %v1685 = vcvt.s32.f32 %v1681
        %v1686 = vcvt.s32.f32 %v1682
        %v1687 = vcvt.s32.f32 %v1683
        %v1688 = vcvt.s32.f32 %v1684
        %1689 = vmatprep.subr.mxu0 0.0
        %1690 = vmatpush1.xpose.msra.mxu0 %v333
        %1691 = vmatprep.subr.mxu0 0.0
        %1692 = vmatpush1.xpose.msra.mxu0 %v337
        %1693 = vmatprep.subr.mxu0 0.0
        %1694 = vmatpush1.xpose.msra.mxu0 %v341
        %1695 = vmatprep.subr.mxu0 0.0
        %1696 = vmatpush1.xpose.msra.mxu0 %v345
        %1697 = vmatprep.subr.mxu0 0.0
        %1698 = vmatpush1.xpose.msra.mxu0 %v349
        %1699 = vmatprep.subr.mxu0 0.0
        %1700 = vmatpush1.xpose.msra.mxu0 %v353
        %1701 = vmatprep.subr.mxu0 0.0
        %1702 = vmatpush1.xpose.msra.mxu0 %v357
        %1703 = vmatprep.subr.mxu0 0.0
        %1704 = vmatpush1.xpose.msra.mxu0 %v361
        %1705 = vmatprep.subr.mxu0 0.0
        %1706 = vmatpush1.xpose.msra.mxu0 %v365
        %1707 = vmatprep.subr.mxu0 0.0
        %1708 = vmatpush1.xpose.msra.mxu0 %v369
        %1709 = vmatprep.subr.mxu0 0.0
        %1710 = vmatpush1.xpose.msra.mxu0 %v373
        %1711 = vmatprep.subr.mxu0 0.0
        %1712 = vmatpush1.xpose.msra.mxu0 %v377
        %1713 = vmatprep.subr.mxu0 0.0
        %1714 = vmatpush1.xpose.msra.mxu0 %v381
        %1715 = vmatprep.subr.mxu0 0.0
        %1716 = vmatpush1.xpose.msra.mxu0 %v385
        %1717 = vmatprep.subr.mxu0 0.0
        %1718 = vmatpush1.xpose.msra.mxu0 %v389
        %1719 = vmatprep.subr.mxu0 0.0
        %1720 = vmatpush1.xpose.msra.mxu0 %v393
        %1721 = vmatprep.subr.mxu0 0.0
        %1722 = vmatpush1.xpose.msra.mxu0 0.0
        %1723 = vmatprep.subr.mxu0 0.0
        %1724 = vmatpush1.xpose.msra.mxu0 0.0
        %1725 = vmatprep.subr.mxu0 0.0
        %1726 = vmatpush1.xpose.msra.mxu0 0.0
        %1727 = vmatprep.subr.mxu0 0.0
        %1728 = vmatpush1.xpose.msra.mxu0 0.0
        %1729 = vmatprep.subr.mxu0 0.0
        %1730 = vmatpush1.xpose.msra.mxu0 0.0
        %1731 = vmatprep.subr.mxu0 0.0
        %1732 = vmatpush1.xpose.msra.mxu0 0.0
        %1733 = vmatprep.subr.mxu0 0.0
        %1734 = vmatpush1.xpose.msra.mxu0 0.0
        %1735 = vmatprep.subr.mxu0 0.0
        %1736 = vmatpush1.xpose.msra.mxu0 0.0
        %1737 = vmatprep.subr.mxu0 0.0
        %1738 = vmatpush1.xpose.msra.mxu0 0.0
        %1739 = vmatprep.subr.mxu0 0.0
        %1740 = vmatpush1.xpose.msra.mxu0 0.0
        %1741 = vmatprep.subr.mxu0 0.0
        %1742 = vmatpush1.xpose.msra.mxu0 0.0
        %1743 = vmatprep.subr.mxu0 0.0
        %1744 = vmatpush1.xpose.msra.mxu0 0.0
        %1745 = vmatprep.subr.mxu0 0.0
        %1746 = vmatpush1.xpose.msra.mxu0 0.0
        %1747 = vmatprep.subr.mxu0 0.0
        %1748 = vmatpush1.xpose.msra.mxu0 0.0
        %1749 = vmatprep.subr.mxu0 0.0
        %1750 = vmatpush1.xpose.msra.mxu0 0.0
        %1751 = vmatprep.subr.mxu0 0.0
        %1752 = vmatpush1.xpose.msra.mxu0 0.0
        %1753 = vmatprep.mubr.f32.mxu0 0.0
        %1754 = vmatmul.mubr.f32.gmra.mrb[0].mxu0 %v1685
        %v1755 = vpop.f32.mrb[0].mxu0
        %v1756 = vadd.f32 0.0, %v1755
        %v1757 = vpop.f32.mrb[0].mxu0
        %1758 = vmatprep.mubr.f32.mxu0 0.0
        %1759 = vmatmul.mubr.f32.gmra.mrb[0].mxu0 %v1686
        %v1760 = vpop.f32.mrb[0].mxu0
        %v1761 = vadd.f32 0.0, %v1760
        %v1762 = vpop.f32.mrb[0].mxu0
        %1763 = vmatprep.mubr.f32.mxu0 0.0
        %1764 = vmatmul.mubr.f32.gmra.mrb[0].mxu0 %v1687
        %v1765 = vpop.f32.mrb[0].mxu0
        %v1766 = vadd.f32 0.0, %v1765
        %v1767 = vpop.f32.mrb[0].mxu0
        %1768 = vmatprep.mubr.f32.mxu0 0.0
        %1769 = vmatmul.mubr.f32.gmra.mrb[0].mxu0 %v1688
        %v1770 = vpop.f32.mrb[0].mxu0
        %v1771 = vadd.f32 0.0, %v1770
        %v1772 = vpop.f32.mrb[0].mxu0
        %1773 = vdwg.mxu0
        %v1774 = vadd.f32 %v1451, %v1756
        %v1775 = vadd.f32 %v1452, %v1761
        %v1776 = vadd.f32 %v1453, %v1766
        %v1777 = vadd.f32 %v1454, %v1771
        %vm1778 = vcmp.eq.s32.totalorder %v397, 3
        %v1779 = vsel %vm1778, 1, 0
        %vm1780 = vcmp.eq.s32.totalorder %v1779, 1
        %v1781 = vsel %vm1780, %v639, 0.0
        %1782 = vmatprep.subr.mxu0 0.0
        %1783 = vmatpush1.xpose.msra.mxu0 %v1685
        %1784 = vmatprep.subr.mxu0 0.0
        %1785 = vmatpush1.xpose.msra.mxu0 %v1686
        %1786 = vmatprep.subr.mxu0 0.0
        %1787 = vmatpush1.xpose.msra.mxu0 %v1687
        %1788 = vmatprep.subr.mxu0 0.0
        %1789 = vmatpush1.xpose.msra.mxu0 %v1688
        %1790 = vmatprep.subr.mxu0 0.0
        %1791 = vmatpush1.xpose.msra.mxu0 0.0
        %1792 = vmatprep.subr.mxu0 0.0
        %1793 = vmatpush1.xpose.msra.mxu0 0.0
        %1794 = vmatprep.subr.mxu0 0.0
        %1795 = vmatpush1.xpose.msra.mxu0 0.0
        %1796 = vmatprep.subr.mxu0 0.0
        %1797 = vmatpush1.xpose.msra.mxu0 0.0
        %1798 = vmatprep.subr.mxu0 0.0
        %1799 = vmatpush1.xpose.msra.mxu0 0.0
        %1800 = vmatprep.subr.mxu0 0.0
        %1801 = vmatpush1.xpose.msra.mxu0 0.0
        %1802 = vmatprep.subr.mxu0 0.0
        %1803 = vmatpush1.xpose.msra.mxu0 0.0
        %1804 = vmatprep.subr.mxu0 0.0
        %1805 = vmatpush1.xpose.msra.mxu0 0.0
        %1806 = vmatprep.subr.mxu0 0.0
        %1807 = vmatpush1.xpose.msra.mxu0 0.0
        %1808 = vmatprep.subr.mxu0 0.0
        %1809 = vmatpush1.xpose.msra.mxu0 0.0
        %1810 = vmatprep.subr.mxu0 0.0
        %1811 = vmatpush1.xpose.msra.mxu0 0.0
        %1812 = vmatprep.subr.mxu0 0.0
        %1813 = vmatpush1.xpose.msra.mxu0 0.0
        %1814 = vmatprep.subr.mxu0 0.0
        %1815 = vmatpush1.xpose.msra.mxu0 0.0
        %1816 = vmatprep.subr.mxu0 0.0
        %1817 = vmatpush1.xpose.msra.mxu0 0.0
        %1818 = vmatprep.subr.mxu0 0.0
        %1819 = vmatpush1.xpose.msra.mxu0 0.0
        %1820 = vmatprep.subr.mxu0 0.0
        %1821 = vmatpush1.xpose.msra.mxu0 0.0
        %1822 = vmatprep.subr.mxu0 0.0
        %1823 = vmatpush1.xpose.msra.mxu0 0.0
        %1824 = vmatprep.subr.mxu0 0.0
        %1825 = vmatpush1.xpose.msra.mxu0 0.0
        %1826 = vmatprep.subr.mxu0 0.0
        %1827 = vmatpush1.xpose.msra.mxu0 0.0
        %1828 = vmatprep.subr.mxu0 0.0
        %1829 = vmatpush1.xpose.msra.mxu0 0.0
        %1830 = vmatprep.subr.mxu0 0.0
        %1831 = vmatpush1.xpose.msra.mxu0 0.0
        %1832 = vmatprep.subr.mxu0 0.0
        %1833 = vmatpush1.xpose.msra.mxu0 0.0
        %1834 = vmatprep.subr.mxu0 0.0
        %1835 = vmatpush1.xpose.msra.mxu0 0.0
        %1836 = vmatprep.subr.mxu0 0.0
        %1837 = vmatpush1.xpose.msra.mxu0 0.0
        %1838 = vmatprep.subr.mxu0 0.0
        %1839 = vmatpush1.xpose.msra.mxu0 0.0
        %1840 = vmatprep.subr.mxu0 0.0
        %1841 = vmatpush1.xpose.msra.mxu0 0.0
        %1842 = vmatprep.subr.mxu0 0.0
        %1843 = vmatpush1.xpose.msra.mxu0 0.0
        %1844 = vmatprep.subr.mxu0 0.0
        %1845 = vmatpush1.xpose.msra.mxu0 0.0
        %1846 = vmatprep.mubr.f32.mxu0 0.0
        %1847 = vmatmul.mubr.f32.gmra.mrb[0].mxu0 %v1781
        %v1848 = vpop.f32.mrb[0].mxu0
        %v1849 = vadd.f32 0.0, %v1848
        %v1850 = vpop.f32.mrb[0].mxu0
        %1851 = vdwg.mxu0
        %v1852 = vadd.f32 %v1529, %v1849
        %1853 = vmatprep.subr.mxu0 0.0
        %1854 = vmatpush1.msra.mxu0 %v1685
        %1855 = vmatprep.subr.mxu0 0.0
        %1856 = vmatpush1.msra.mxu0 %v1686
        %1857 = vmatprep.subr.mxu0 0.0
        %1858 = vmatpush1.msra.mxu0 %v1687
        %1859 = vmatprep.subr.mxu0 0.0
        %1860 = vmatpush1.msra.mxu0 %v1688
        %1861 = vmatprep.subr.mxu0 0.0
        %1862 = vmatpush1.msra.mxu0 0.0
        %1863 = vmatprep.subr.mxu0 0.0
        %1864 = vmatpush1.msra.mxu0 0.0
        %1865 = vmatprep.subr.mxu0 0.0
        %1866 = vmatpush1.msra.mxu0 0.0
        %1867 = vmatprep.subr.mxu0 0.0
        %1868 = vmatpush1.msra.mxu0 0.0
        %1869 = vmatprep.subr.mxu0 0.0
        %1870 = vmatpush1.msra.mxu0 0.0
        %1871 = vmatprep.subr.mxu0 0.0
        %1872 = vmatpush1.msra.mxu0 0.0
        %1873 = vmatprep.subr.mxu0 0.0
        %1874 = vmatpush1.msra.mxu0 0.0
        %1875 = vmatprep.subr.mxu0 0.0
        %1876 = vmatpush1.msra.mxu0 0.0
        %1877 = vmatprep.subr.mxu0 0.0
        %1878 = vmatpush1.msra.mxu0 0.0
        %1879 = vmatprep.subr.mxu0 0.0
        %1880 = vmatpush1.msra.mxu0 0.0
        %1881 = vmatprep.subr.mxu0 0.0
        %1882 = vmatpush1.msra.mxu0 0.0
        %1883 = vmatprep.subr.mxu0 0.0
        %1884 = vmatpush1.msra.mxu0 0.0
        %1885 = vmatprep.subr.mxu0 0.0
        %1886 = vmatpush1.msra.mxu0 0.0
        %1887 = vmatprep.subr.mxu0 0.0
        %1888 = vmatpush1.msra.mxu0 0.0
        %1889 = vmatprep.subr.mxu0 0.0
        %1890 = vmatpush1.msra.mxu0 0.0
        %1891 = vmatprep.subr.mxu0 0.0
        %1892 = vmatpush1.msra.mxu0 0.0
        %1893 = vmatprep.subr.mxu0 0.0
        %1894 = vmatpush1.msra.mxu0 0.0
        %1895 = vmatprep.subr.mxu0 0.0
        %1896 = vmatpush1.msra.mxu0 0.0
        %1897 = vmatprep.subr.mxu0 0.0
        %1898 = vmatpush1.msra.mxu0 0.0
        %1899 = vmatprep.subr.mxu0 0.0
        %1900 = vmatpush1.msra.mxu0 0.0
        %1901 = vmatprep.subr.mxu0 0.0
        %1902 = vmatpush1.msra.mxu0 0.0
        %1903 = vmatprep.subr.mxu0 0.0
        %1904 = vmatpush1.msra.mxu0 0.0
        %1905 = vmatprep.subr.mxu0 0.0
        %1906 = vmatpush1.msra.mxu0 0.0
        %1907 = vmatprep.subr.mxu0 0.0
        %1908 = vmatpush1.msra.mxu0 0.0
        %1909 = vmatprep.subr.mxu0 0.0
        %1910 = vmatpush1.msra.mxu0 0.0
        %1911 = vmatprep.subr.mxu0 0.0
        %1912 = vmatpush1.msra.mxu0 0.0
        %1913 = vmatprep.subr.mxu0 0.0
        %1914 = vmatpush1.msra.mxu0 0.0
        %1915 = vmatprep.subr.mxu0 0.0
        %1916 = vmatpush1.msra.mxu0 0.0
        %1917 = vmatprep.mubr.f32.mxu0 0.0
        %1918 = vmatmul.mubr.f32.gmra.mrb[0].mxu0 %v1136
        %v1919 = vpop.f32.mrb[0].mxu0
        %v1920 = vadd.f32 0.0, %v1919
        %v1921 = vpop.f32.mrb[0].mxu0
        %1922 = vdwg.mxu0
        %v1923 = vadd.f32 %v1600, %v1920
        %v1924 = vadd.f32 %v1601, %v1606
        %v1925 = vadd.f32 %v1602, %v1608
        %v1926 = vadd.f32 %v1603, %v1610
        %v1927 = vadd.f32 %v1604, %v1612
        %1928 = vst [vmem:[%s294] sm:$0xff] %v1774
        %1929 = vst [vmem:[%s294 + $0x8] sm:$0xff] %v1775
        %1930 = vst [vmem:[%s294 + $0x10] sm:$0xff] %v1776
        %1931 = vst [vmem:[%s294 + $0x18] sm:$0xff] %v1777
        %v1932 = vcvt.f32.s32.to.zero.pseudo %v1852
        %vm1933 = vcmask 257024
        %1934 = vst.msk [vmem:[%s301] sm:$0xf] %vm1933, %v1932
        %1935 = vst [vmem:[%s307] sm:$0x1] %v1923
        %v1936 = vmul.f32 %v418, %v418
        %v1937 = vmul.f32 %v419, %v419
        %v1938 = vmul.f32 %v420, %v420
        %v1939 = vmul.f32 %v421, %v421
        %1940 = vadd.xlane.f32.xlu0 %v1936
        %v1941 = vpop.xlane.xlu0 %1940
        %1942 = vadd.xlane.f32.xlu0 %v1937
        %v1943 = vpop.xlane.xlu0 %1942
        %1944 = vadd.xlane.f32.xlu0 %v1938
        %v1945 = vpop.xlane.xlu0 %1944
        %1946 = vadd.xlane.f32.xlu0 %v1939
        %v1947 = vpop.xlane.xlu0 %1946
        %v1948 = vmul.f32 %v1924, 2.0
        %v1949 = vmul.f32 %v1925, 2.0
        %v1950 = vmul.f32 %v1926, 2.0
        %v1951 = vmul.f32 %v1927, 2.0
        %v1952 = vadd.f32 %v1941, %v1948
        %v1953 = vadd.f32 %v1943, %v1949
        %v1954 = vadd.f32 %v1945, %v1950
        %v1955 = vadd.f32 %v1947, %v1951
        %v1956 = vsel %vm406, %v1952, 0.0
        %v1957 = vsel %vm407, %v1953, 0.0
        %v1958 = vsel %vm408, %v1954, 0.0
        %v1959 = vsel %vm409, %v1955, 0.0
        %vm1960 = vcmask 7168
        %v1961 = vsel %vm1960, %v1956, 0.0
        %v1962 = vsel %vm1960, %v1957, 0.0
        %v1963 = vadd.f32 %v1961, %v1962
        %v1964 = vsel %vm1960, %v1958, 0.0
        %v1965 = vadd.f32 %v1963, %v1964
        %v1966 = vsel %vm1960, %v1959, 0.0
        %v1967 = vadd.f32 %v1965, %v1966
        %1968 = vadd.xlane.f32.xlu0 %v1967
        %v1969 = vpop.xlane.xlu0 %1968
        %v1970 = vrot.slane %v1969, 4
        %v1971 = vadd.f32 %v1969, %v1970
        %v1972 = vrot.slane %v1971, 2
        %v1973 = vadd.f32 %v1971, %v1972
        %v1974 = vrot.slane %v1973, 1
        %v1975 = vadd.f32 %v1973, %v1974
        %s1976 = vtos %v1975
        %v1977 = vstv %s1976
        %vm1978 = vcmask 0
        %1979 = vst.msk [vmem:[%s325] sm:$0x1] %vm1978, %v1977
        %s1980 = sand.u32 %s104, 1
        %s1981 = scalar_lea.sflag [#allocation4], %s1980
        %s1982 = sand.u32 %s104, 1
        %s1983 = smul.addr %s1982, 32
        %s1984 = scalar_lea.vmem [#allocation7], %s1983
        %s1985 = sand.u32 %s28, 1
        %s1986 = scalar_lea.sflag [#allocation9], %s1985
        %s1987 = sand.u32 %s130, 1
        %s1988 = smul.addr %s1987, 4
        %s1989 = scalar_lea.vmem [#allocation8], %s1988
        %s1990 = sand.u32 %s28, 1
        %s1991 = scalar_lea.sflag [#allocation9], %s1990
        %s1992 = sand.u32 %s156, 1
        %s1993 = scalar_lea.vmem [#allocation10], %s1992
        %p1994 = scmp.lt.s32.totalorder %s28, 2
        %s1995 = scalar_select %p1994, %s28, 2
        %s1996 = scalar_lea.vmem %s6, %s1995
        // Predicated region
        $region41: #{tpu_custom_call.1} parent=31 // pred_check
          %p1997 = pneg %p114
        $region42: #{tpu_custom_call.1} parent=31 // pred_check_branch
          %1999 = sbr.rel (%p1997) target = $region44
        $region43: #{tpu_custom_call.1} parent=31 // pred_region
          %s2000 = smul.u32 4, %s28
          %s2001 = ssub.s32 9, %s2000
          %p2002 = scmp.lt.s32.totalorder %s2001, 4
          %s2003 = scalar_select %p2002, %s2001, 4
          %s2004 = smul.u32 128, %s2003
          %s2006 = ssub.s32 512, %s2004
          %2007 = vsyncadd %s1981, %s2006
          %p2008 = scmp.ne.s32.totalorder 0, %s2004
          %s2009 = smul.addr %s2000, 128
          %s2010 = scalar_lea.hbm %s3, %s2009
          %s2011 = smul.u32 8, %s2003
          %s2012 = sshll.u32 %s1984, 4
          %s2013 = int_to_ptr.vmem [resolvable:$true] %s2012
          %s2014 = sshll.u32 %s2011, 4
          %2018 = dma.vmem_to_hbm [thread:$0]  (%p2008), %s2013, %s2014, %s2010, %s1981, 128, 128, 8
        $region44: #{tpu_custom_call.1} parent=31 // pred_fallthru
          _
        // Predicated region
        $region45: #{tpu_custom_call.1} parent=31 // pred_check
          %p2019 = pneg %p140
        $region46: #{tpu_custom_call.1} parent=31 // pred_check_branch
          %2021 = sbr.rel (%p2019) target = $region48
        $region47: #{tpu_custom_call.1} parent=31 // pred_region
          %s2023 = ssub.s32 64, 64
          %2024 = vsyncadd %s1986, %s2023
          %s2025 = smul.addr %s28, 64
          %s2026 = scalar_lea.hbm %s4, %s2025
          %s2028 = sshll.u32 %s1989, 4
          %s2029 = int_to_ptr.vmem [resolvable:$true] %s2028
          %2031 = dma.vmem_to_hbm [thread:$0]  %s2029, 64, %s2026, %s1986
        $region48: #{tpu_custom_call.1} parent=31 // pred_fallthru
          _
        // Predicated region
        $region49: #{tpu_custom_call.1} parent=31 // pred_check
          %p2032 = pneg %p166
        $region50: #{tpu_custom_call.1} parent=31 // pred_check_branch
          %2034 = sbr.rel (%p2032) target = $region52
        $region51: #{tpu_custom_call.1} parent=31 // pred_region
          %s2036 = ssub.s32 16, 16
          %2037 = vsyncadd %s1991, %s2036
          %s2038 = smul.addr %s28, 16
          %s2039 = scalar_lea.hbm %s5, %s2038
          %s2041 = sshll.u32 %s1993, 4
          %s2042 = int_to_ptr.vmem [resolvable:$true] %s2041
          %2044 = dma.vmem_to_hbm [thread:$0]  %s2042, 16, %s2039, %s1991
        $region52: #{tpu_custom_call.1} parent=31 // pred_fallthru
          _
        // Predicated region
        $region53: #{tpu_custom_call.1} parent=31 // pred_check
          %p2045 = pneg %p192
        $region54: #{tpu_custom_call.1} parent=31 // pred_check_branch
          %2047 = sbr.rel (%p2045) target = $region56
        $region55: #{tpu_custom_call.1} parent=31 // pred_region
          _
        $region56: #{tpu_custom_call.1} parent=31 // pred_fallthru
          _
      $region32: #{tpu_custom_call.1} parent=5 // pred_fallthru
        _
      %p2048 = scmp.le.s32.totalorder 2, %s23
      // Predicated region
      $region57: #{tpu_custom_call.1} parent=5 // pred_check
        %p2049 = pneg %p2048
      $region58: #{tpu_custom_call.1} parent=5 // pred_check_branch
        %2051 = sbr.rel (%p2049) target = $region60
      $region59: #{tpu_custom_call.1} parent=5 // pred_region
        %s2052 = ssub.s32 %s23, 2
        // Predicated region
        $region61: #{tpu_custom_call.1} parent=59 // pred_check
          %p2053 = pneg %p120
        $region62: #{tpu_custom_call.1} parent=59 // pred_check_branch
          %2055 = sbr.rel (%p2053) target = $region64
        $region63: #{tpu_custom_call.1} parent=59 // pred_region
          %s2056 = sand.u32 %s105, 1
          %s2057 = scalar_lea.sflag [#allocation4], %s2056
          %s2058 = sand.u32 %s105, 1
          %s2059 = smul.addr %s2058, 32
          %s2060 = scalar_lea.vmem [#allocation7], %s2059
          %2061 = dma.done %s2057, 512
        $region64: #{tpu_custom_call.1} parent=59 // pred_fallthru
          _
        // Predicated region
        $region65: #{tpu_custom_call.1} parent=59 // pred_check
          %p2062 = pneg %p146
        $region66: #{tpu_custom_call.1} parent=59 // pred_check_branch
          %2064 = sbr.rel (%p2062) target = $region68
        $region67: #{tpu_custom_call.1} parent=59 // pred_region
          %s2065 = sand.u32 %s29, 1
          %s2066 = scalar_lea.sflag [#allocation9], %s2065
          %s2067 = sand.u32 %s131, 1
          %s2068 = smul.addr %s2067, 4
          %s2069 = scalar_lea.vmem [#allocation8], %s2068
          %2070 = dma.done %s2066, 64
        $region68: #{tpu_custom_call.1} parent=59 // pred_fallthru
          _
        // Predicated region
        $region69: #{tpu_custom_call.1} parent=59 // pred_check
          %p2071 = pneg %p172
        $region70: #{tpu_custom_call.1} parent=59 // pred_check_branch
          %2073 = sbr.rel (%p2071) target = $region72
        $region71: #{tpu_custom_call.1} parent=59 // pred_region
          %s2074 = sand.u32 %s29, 1
          %s2075 = scalar_lea.sflag [#allocation9], %s2074
          %s2076 = sand.u32 %s157, 1
          %s2077 = scalar_lea.vmem [#allocation10], %s2076
          %2078 = dma.done %s2075, 16
        $region72: #{tpu_custom_call.1} parent=59 // pred_fallthru
          _
        // Predicated region
        $region73: #{tpu_custom_call.1} parent=59 // pred_check
          %p2079 = pneg %p198
        $region74: #{tpu_custom_call.1} parent=59 // pred_check_branch
          %2081 = sbr.rel (%p2079) target = $region76
        $region75: #{tpu_custom_call.1} parent=59 // pred_region
          %p2082 = scmp.lt.s32.totalorder %s29, 2
          %s2083 = scalar_select %p2082, %s29, 2
          %s2084 = scalar_lea.vmem %s6, %s2083
        $region76: #{tpu_custom_call.1} parent=59 // pred_fallthru
          _
      $region60: #{tpu_custom_call.1} parent=5 // pred_fallthru
        _
    $region6: #{tpu_custom_call.1} parent=1 // loop_footer
      %s27 = sadd.s32 1, %s23
    $region7: #{tpu_custom_call.1} parent=1 // loop_footer_branch
      %22 = sbr.rel target = $region3
    $region8: #{tpu_custom_call.1} parent=1 // loop_exit
      _
    %2085 = vsyncpa [#allocation3], 1
    %s2086 = scalar_lea.sflag [#allocation3], 1
    %2087 = vsyncpa %s2086, 1
    %2088 = vsyncpa [#allocation6], 1
    %2089 = vsyncpa [#allocation4], 1
    %s2090 = scalar_lea.sflag [#allocation4], 1
    %2091 = vsyncpa %s2090, 1
    %2092 = vsyncpa [#allocation9], 1
    %s2093 = scalar_lea.sflag [#allocation9], 1
    %2094 = vsyncpa %s2093, 1

</llo_original>
